<compile_context>
chip_gen: v7x
topology: tpu7x:2x2x1
jax: 0.10.0
libtpu: 0.0.40
codegen_flags: <defaults>
</compile_context>

<pallas_src>
import numpy as np

import jax
import jax.numpy as jnp
from jax import lax
from jax.experimental import pallas as pl
from jax.experimental.pallas import tpu as pltpu


# --------------------------------------------------------------------------
# Fused kernel
# --------------------------------------------------------------------------
def _make_ds_layer_kernel(H, W):
    Hp, Wp = H + 2, W + 2

    def kernel(mask_ref, x_ref, w1_ref, b1_ref, w2_ref, b2_ref,
               w3_ref, b3_ref, o_ref, pad_ref):
        Cin, PL = pad_ref.shape

        # ---- in-kernel zero padding: (Cin, H*W) -> padded-flat (Cin, PL) --
        pad_ref[...] = jnp.zeros_like(pad_ref)
        x2 = x_ref[0]                                    # (Cin, H*W) f32
        for r in range(H):                               # H small row writes
            pad_ref[:, pl.ds((r + 1) * Wp + 1, W)] = x2[:, r * W:(r + 1) * W]

        mask = mask_ref[...]                             # (1, PL) f32 interior mask

        def shift_lanes(a, s):
            # b[:, p] = a[:, p + s]   (static shift, zero fill at the ends).
            c = a.shape[0]
            if s == 0:
                return a
            if s > 0:
                return jnp.concatenate(
                    [a[:, s:], jnp.zeros((c, s), a.dtype)], axis=1)
            return jnp.concatenate(
                [jnp.zeros((c, -s), a.dtype), a[:, :s]], axis=1)

        def conv3x3_relu(act_f32, w_ref_, b_ref_):
            # act_f32: (C, PL) padded-flat activation (border ring is zero).
            a = act_f32.astype(jnp.bfloat16)             # bf16 MXU inputs
            cols = jnp.concatenate(                      # im2col: (9*C, PL)
                [shift_lanes(a, (dy - 1) * Wp + (dx - 1))
                 for dy in range(3) for dx in range(3)], axis=0)
            y = jnp.dot(w_ref_[...], cols,               # ONE K=9*C matmul
                        preferred_element_type=jnp.float32)
            y = jnp.maximum(y + b_ref_[...], 0.0)        # bias + ReLU
            return y * mask                              # re-zero border ring

        a1 = conv3x3_relu(pad_ref[...], w1_ref, b1_ref)  # (64, PL) f32
        a2 = conv3x3_relu(a1, w2_ref, b2_ref)            # (64, PL) f32

        # ---- 1x1 conv (64 -> 1) folded into the epilogue (VPU mul + reduce)
        y = jnp.sum(a2 * w3_ref[...], axis=0, keepdims=True) + b3_ref[...]
        o_ref[...] = y.reshape(1, 1, PL).astype(o_ref.dtype)   # lane-dense store

    return kernel


# --------------------------------------------------------------------------
# Wrapper (layout plumbing only; all heavy work is inside the one kernel)
# --------------------------------------------------------------------------
def _pack_3x3(w_hwio):
    # (3,3,Cin,Cout) HWIO -> (Cout, 9*Cin) in (dy, dx, ci) order, matching
    # the im2col stacking inside the kernel.
    cout = w_hwio.shape[-1]
    return jnp.transpose(w_hwio, (3, 0, 1, 2)).reshape(cout, -1)


def ds_layer_forward(x_nchw, params):
    """Pallas implementation of DSLayer.forward. Input/output are NCHW."""
    w1, b1, w2, b2, w3, b3 = params
    N, Cin, H, W = x_nchw.shape
    Cmid = w1.shape[-1]
    Hp, Wp = H + 2, W + 2
    P = Hp * Wp
    PL = pl.cdiv(P, 128) * 128        # lane-pad the flattened padded spatial axis

    # Layout / dtype plumbing (free or tiny XLA glue).
    xf = x_nchw.reshape(N, Cin, H * W).astype(jnp.float32)
    w1p = _pack_3x3(w1).astype(jnp.bfloat16)            # (Cmid, 9*Cin)
    w2p = _pack_3x3(w2).astype(jnp.bfloat16)            # (Cmid, 9*Cmid)
    b1c = b1.reshape(Cmid, 1).astype(jnp.float32)
    b2c = b2.reshape(Cmid, 1).astype(jnp.float32)
    w3c = w3.reshape(Cmid, 1).astype(jnp.float32)
    b3c = b3.reshape(1, 1).astype(jnp.float32)

    # Interior mask over padded-flat positions (1 inside the HxW image).
    idx = np.arange(PL)
    py, px = idx // Wp, idx % Wp
    interior = (idx < P) & (py >= 1) & (py <= H) & (px >= 1) & (px <= W)
    mask = jnp.asarray(interior.astype(np.float32)).reshape(1, PL)

    kernel = _make_ds_layer_kernel(H, W)

    out_pad = pl.pallas_call(
        kernel,
        out_shape=jax.ShapeDtypeStruct((N, 1, PL), jnp.float32),
        grid=(N,),
        in_specs=[
            pl.BlockSpec((1, PL), lambda n: (0, 0)),              # mask
            pl.BlockSpec((1, Cin, H * W), lambda n: (n, 0, 0)),   # x
            pl.BlockSpec(w1p.shape, lambda n: (0, 0)),            # w1 packed
            pl.BlockSpec(b1c.shape, lambda n: (0, 0)),            # b1
            pl.BlockSpec(w2p.shape, lambda n: (0, 0)),            # w2 packed
            pl.BlockSpec(b2c.shape, lambda n: (0, 0)),            # b2
            pl.BlockSpec(w3c.shape, lambda n: (0, 0)),            # w3 (1x1)
            pl.BlockSpec(b3c.shape, lambda n: (0, 0)),            # b3
        ],
        out_specs=pl.BlockSpec((1, 1, PL), lambda n: (n, 0, 0)),
        scratch_shapes=[pltpu.VMEM((Cin, PL), jnp.float32)],      # padded input
        compiler_params=pltpu.CompilerParams(
            dimension_semantics=("parallel",)),                   # v7x: 2 TCs
    )(mask, xf, w1p, b1c, w2p, b2c, w3c, b3c)

    # Crop the interior of the padded-flat output and restore NCHW (free glue).
    out = out_pad.reshape(N, PL)[:, :P].reshape(N, Hp, Wp)[:, 1:H + 1, 1:W + 1]
    return out[:, None, :, :]


# --------------------------------------------------------------------------
# Pure-JAX reference (f32, for correctness check)
# --------------------------------------------------------------------------
def ds_layer_ref(x_nchw, params):
    w1, b1, w2, b2, w3, b3 = params
    dn = ("NHWC", "HWIO", "NHWC")
    cmid = w1.shape[-1]
    x = jnp.transpose(x_nchw, (0, 2, 3, 1))
    x = lax.conv_general_dilated(x, w1, (1, 1), "SAME", dimension_numbers=dn)
    x = jnp.maximum(x + b1, 0.0)
    x = lax.conv_general_dilated(x, w2, (1, 1), "SAME", dimension_numbers=dn)
    x = jnp.maximum(x + b2, 0.0)
    x = lax.conv_general_dilated(x, w3.reshape(1, 1, cmid, 1), (1, 1), "SAME",
                                 dimension_numbers=dn)
    x = x + b3
    return jnp.transpose(x, (0, 3, 1, 2))


# --------------------------------------------------------------------------
# Main
# --------------------------------------------------------------------------
if __name__ == "__main__":
    key = jax.random.PRNGKey(0)
    k = jax.random.split(key, 8)

    N, Cin, H, W = 2, 64, 8, 8        # in_channel=64 per the module default
    Cmid = 64

    # Deterministic synthetic parameters (HWIO layout for conv weights).
    w1 = jax.random.normal(k[0], (3, 3, Cin, Cmid), jnp.float32) * 0.05
    b1 = jax.random.normal(k[1], (Cmid,), jnp.float32) * 0.05
    w2 = jax.random.normal(k[2], (3, 3, Cmid, Cmid), jnp.float32) * 0.05
    b2 = jax.random.normal(k[3], (Cmid,), jnp.float32) * 0.05
    w3 = jax.random.normal(k[4], (Cmid, 1), jnp.float32) * 0.05    # 1x1 conv
    b3 = jax.random.normal(k[5], (1,), jnp.float32) * 0.05
    params = (w1, b1, w2, b2, w3, b3)

    x = jax.random.normal(k[6], (N, Cin, H, W), jnp.float32)       # NCHW input

    out = jax.block_until_ready(ds_layer_forward(x, params))
    ref = jax.block_until_ready(ds_layer_ref(x, params))

    assert out.shape == (N, 1, H, W), out.shape
    # Tolerance sized for bf16 MXU inputs (f32 accumulation) vs. the f32 ref.
    assert jnp.allclose(out, ref, rtol=3e-2, atol=3e-2), (
        float(jnp.max(jnp.abs(out - ref))))

    print("KERNEL_OK")
</pallas_src>

<mosaic_0001>
module attributes {stable_mosaic.version = 11 : i64} {
  func.func @kernel(%arg0: i32, %arg1: memref<1x128xf32, #tpu.memory_space<vmem>>, %arg2: memref<1x64x64xf32, #tpu.memory_space<vmem>>, %arg3: memref<64x576xbf16, #tpu.memory_space<vmem>>, %arg4: memref<64x1xf32, #tpu.memory_space<vmem>>, %arg5: memref<64x576xbf16, #tpu.memory_space<vmem>>, %arg6: memref<64x1xf32, #tpu.memory_space<vmem>>, %arg7: memref<64x1xf32, #tpu.memory_space<vmem>>, %arg8: memref<1x1xf32, #tpu.memory_space<vmem>>, %arg9: memref<1x1x128xf32, #tpu.memory_space<vmem>>, %arg10: memref<64x128xf32, #tpu.memory_space<vmem>>) attributes {dimension_semantics = [#tpu.dimension_semantics<parallel>], iteration_bounds = array<i64: 2>, scalar_prefetch = 0 : i64, scratch_operands = 1 : i64, tpu.core_type = #tpu.core_type<tc>, window_params = [{pipeline_mode = #tpu.pipeline_mode<synchronous>, transform_indices = @transform_0, window_bounds = array<i64: 1, 128>}, {transform_indices = @transform_1, window_bounds = array<i64: 1, 64, 64>}, {pipeline_mode = #tpu.pipeline_mode<synchronous>, transform_indices = @transform_2, window_bounds = array<i64: 64, 576>}, {pipeline_mode = #tpu.pipeline_mode<synchronous>, transform_indices = @transform_3, window_bounds = array<i64: 64, 1>}, {pipeline_mode = #tpu.pipeline_mode<synchronous>, transform_indices = @transform_4, window_bounds = array<i64: 64, 576>}, {pipeline_mode = #tpu.pipeline_mode<synchronous>, transform_indices = @transform_5, window_bounds = array<i64: 64, 1>}, {pipeline_mode = #tpu.pipeline_mode<synchronous>, transform_indices = @transform_6, window_bounds = array<i64: 64, 1>}, {pipeline_mode = #tpu.pipeline_mode<synchronous>, transform_indices = @transform_7, window_bounds = array<i64: 1, 1>}, {transform_indices = @transform_8, window_bounds = array<i64: 1, 1, 128>}]} {
    %cst = arith.constant 0.000000e+00 : f32
    %0 = vector.broadcast %cst : f32 to vector<64x128xf32>
    %c0 = arith.constant 0 : index
    %c0_0 = arith.constant 0 : index
    %1 = vector.load %arg10[%c0, %c0_0] : memref<64x128xf32, #tpu.memory_space<vmem>>, vector<64x128xf32>
    tpu.vector_store %arg10[%c0, %c0_0], %0 {strides = array<i32>} : memref<64x128xf32, #tpu.memory_space<vmem>>, vector<64x128xf32>,
    %c0_1 = arith.constant 0 : index
    %c0_2 = arith.constant 0 : index
    %c0_3 = arith.constant 0 : index
    %2 = vector.load %arg2[%c0_1, %c0_2, %c0_3] : memref<1x64x64xf32, #tpu.memory_space<vmem>>, vector<1x64x64xf32>
    %3 = vector.shape_cast %2 : vector<1x64x64xf32> to vector<64x64xf32>
    %4 = vector.extract_strided_slice %3 {offsets = [0, 0], sizes = [64, 8], strides = [1, 1]} : vector<64x64xf32> to vector<64x8xf32>
    %c0_4 = arith.constant 0 : index
    %c11 = arith.constant 11 : index
    %5 = vector.load %arg10[%c0_4, %c11] : memref<64x128xf32, #tpu.memory_space<vmem>>, vector<64x8xf32>
    tpu.vector_store %arg10[%c0_4, %c11], %4 {strides = array<i32>} : memref<64x128xf32, #tpu.memory_space<vmem>>, vector<64x8xf32>,
    %6 = vector.extract_strided_slice %3 {offsets = [0, 8], sizes = [64, 8], strides = [1, 1]} : vector<64x64xf32> to vector<64x8xf32>
    %c0_5 = arith.constant 0 : index
    %c21 = arith.constant 21 : index
    %7 = vector.load %arg10[%c0_5, %c21] : memref<64x128xf32, #tpu.memory_space<vmem>>, vector<64x8xf32>
    tpu.vector_store %arg10[%c0_5, %c21], %6 {strides = array<i32>} : memref<64x128xf32, #tpu.memory_space<vmem>>, vector<64x8xf32>,
    %8 = vector.extract_strided_slice %3 {offsets = [0, 16], sizes = [64, 8], strides = [1, 1]} : vector<64x64xf32> to vector<64x8xf32>
    %c0_6 = arith.constant 0 : index
    %c31 = arith.constant 31 : index
    %9 = vector.load %arg10[%c0_6, %c31] : memref<64x128xf32, #tpu.memory_space<vmem>>, vector<64x8xf32>
    tpu.vector_store %arg10[%c0_6, %c31], %8 {strides = array<i32>} : memref<64x128xf32, #tpu.memory_space<vmem>>, vector<64x8xf32>,
    %10 = vector.extract_strided_slice %3 {offsets = [0, 24], sizes = [64, 8], strides = [1, 1]} : vector<64x64xf32> to vector<64x8xf32>
    %c0_7 = arith.constant 0 : index
    %c41 = arith.constant 41 : index
    %11 = vector.load %arg10[%c0_7, %c41] : memref<64x128xf32, #tpu.memory_space<vmem>>, vector<64x8xf32>
    tpu.vector_store %arg10[%c0_7, %c41], %10 {strides = array<i32>} : memref<64x128xf32, #tpu.memory_space<vmem>>, vector<64x8xf32>,
    %12 = vector.extract_strided_slice %3 {offsets = [0, 32], sizes = [64, 8], strides = [1, 1]} : vector<64x64xf32> to vector<64x8xf32>
    %c0_8 = arith.constant 0 : index
    %c51 = arith.constant 51 : index
    %13 = vector.load %arg10[%c0_8, %c51] : memref<64x128xf32, #tpu.memory_space<vmem>>, vector<64x8xf32>
    tpu.vector_store %arg10[%c0_8, %c51], %12 {strides = array<i32>} : memref<64x128xf32, #tpu.memory_space<vmem>>, vector<64x8xf32>,
    %14 = vector.extract_strided_slice %3 {offsets = [0, 40], sizes = [64, 8], strides = [1, 1]} : vector<64x64xf32> to vector<64x8xf32>
    %c0_9 = arith.constant 0 : index
    %c61 = arith.constant 61 : index
    %15 = vector.load %arg10[%c0_9, %c61] : memref<64x128xf32, #tpu.memory_space<vmem>>, vector<64x8xf32>
    tpu.vector_store %arg10[%c0_9, %c61], %14 {strides = array<i32>} : memref<64x128xf32, #tpu.memory_space<vmem>>, vector<64x8xf32>,
    %16 = vector.extract_strided_slice %3 {offsets = [0, 48], sizes = [64, 8], strides = [1, 1]} : vector<64x64xf32> to vector<64x8xf32>
    %c0_10 = arith.constant 0 : index
    %c71 = arith.constant 71 : index
    %17 = vector.load %arg10[%c0_10, %c71] : memref<64x128xf32, #tpu.memory_space<vmem>>, vector<64x8xf32>
    tpu.vector_store %arg10[%c0_10, %c71], %16 {strides = array<i32>} : memref<64x128xf32, #tpu.memory_space<vmem>>, vector<64x8xf32>,
    %18 = vector.extract_strided_slice %3 {offsets = [0, 56], sizes = [64, 8], strides = [1, 1]} : vector<64x64xf32> to vector<64x8xf32>
    %c0_11 = arith.constant 0 : index
    %c81 = arith.constant 81 : index
    %19 = vector.load %arg10[%c0_11, %c81] : memref<64x128xf32, #tpu.memory_space<vmem>>, vector<64x8xf32>
    tpu.vector_store %arg10[%c0_11, %c81], %18 {strides = array<i32>} : memref<64x128xf32, #tpu.memory_space<vmem>>, vector<64x8xf32>,
    %c0_12 = arith.constant 0 : index
    %c0_13 = arith.constant 0 : index
    %20 = vector.load %arg1[%c0_12, %c0_13] : memref<1x128xf32, #tpu.memory_space<vmem>>, vector<1x128xf32>
    %c0_14 = arith.constant 0 : index
    %c0_15 = arith.constant 0 : index
    %21 = vector.load %arg10[%c0_14, %c0_15] : memref<64x128xf32, #tpu.memory_space<vmem>>, vector<64x128xf32>
    %22 = arith.truncf %21 : vector<64x128xf32> to vector<64x128xbf16>
    %cst_16 = arith.constant 0.000000e+00 : bf16
    %23 = vector.broadcast %cst_16 : bf16 to vector<64x11xbf16>
    %24 = vector.extract_strided_slice %22 {offsets = [0, 0], sizes = [64, 117], strides = [1, 1]} : vector<64x128xbf16> to vector<64x117xbf16>
    %25 = tpu.concatenate %23, %24 in 1 : vector<64x11xbf16>, vector<64x117xbf16> -> vector<64x128xbf16>
    %cst_17 = arith.constant 0.000000e+00 : bf16
    %26 = vector.broadcast %cst_17 : bf16 to vector<64x10xbf16>
    %27 = vector.extract_strided_slice %22 {offsets = [0, 0], sizes = [64, 118], strides = [1, 1]} : vector<64x128xbf16> to vector<64x118xbf16>
    %28 = tpu.concatenate %26, %27 in 1 : vector<64x10xbf16>, vector<64x118xbf16> -> vector<64x128xbf16>
    %cst_18 = arith.constant 0.000000e+00 : bf16
    %29 = vector.broadcast %cst_18 : bf16 to vector<64x9xbf16>
    %30 = vector.extract_strided_slice %22 {offsets = [0, 0], sizes = [64, 119], strides = [1, 1]} : vector<64x128xbf16> to vector<64x119xbf16>
    %31 = tpu.concatenate %29, %30 in 1 : vector<64x9xbf16>, vector<64x119xbf16> -> vector<64x128xbf16>
    %cst_19 = arith.constant 0.000000e+00 : bf16
    %32 = vector.broadcast %cst_19 : bf16 to vector<64x1xbf16>
    %33 = vector.extract_strided_slice %22 {offsets = [0, 0], sizes = [64, 127], strides = [1, 1]} : vector<64x128xbf16> to vector<64x127xbf16>
    %34 = tpu.concatenate %32, %33 in 1 : vector<64x1xbf16>, vector<64x127xbf16> -> vector<64x128xbf16>
    %35 = vector.extract_strided_slice %22 {offsets = [0, 1], sizes = [64, 127], strides = [1, 1]} : vector<64x128xbf16> to vector<64x127xbf16>
    %cst_20 = arith.constant 0.000000e+00 : bf16
    %36 = vector.broadcast %cst_20 : bf16 to vector<64x1xbf16>
    %37 = tpu.concatenate %35, %36 in 1 : vector<64x127xbf16>, vector<64x1xbf16> -> vector<64x128xbf16>
    %38 = vector.extract_strided_slice %22 {offsets = [0, 9], sizes = [64, 119], strides = [1, 1]} : vector<64x128xbf16> to vector<64x119xbf16>
    %cst_21 = arith.constant 0.000000e+00 : bf16
    %39 = vector.broadcast %cst_21 : bf16 to vector<64x9xbf16>
    %40 = tpu.concatenate %38, %39 in 1 : vector<64x119xbf16>, vector<64x9xbf16> -> vector<64x128xbf16>
    %41 = vector.extract_strided_slice %22 {offsets = [0, 10], sizes = [64, 118], strides = [1, 1]} : vector<64x128xbf16> to vector<64x118xbf16>
    %cst_22 = arith.constant 0.000000e+00 : bf16
    %42 = vector.broadcast %cst_22 : bf16 to vector<64x10xbf16>
    %43 = tpu.concatenate %41, %42 in 1 : vector<64x118xbf16>, vector<64x10xbf16> -> vector<64x128xbf16>
    %44 = vector.extract_strided_slice %22 {offsets = [0, 11], sizes = [64, 117], strides = [1, 1]} : vector<64x128xbf16> to vector<64x117xbf16>
    %cst_23 = arith.constant 0.000000e+00 : bf16
    %45 = vector.broadcast %cst_23 : bf16 to vector<64x11xbf16>
    %46 = tpu.concatenate %44, %45 in 1 : vector<64x117xbf16>, vector<64x11xbf16> -> vector<64x128xbf16>
    %47 = tpu.concatenate %25, %28, %31, %34, %22, %37, %40, %43, %46 in 0 : vector<64x128xbf16>, vector<64x128xbf16>, vector<64x128xbf16>, vector<64x128xbf16>, vector<64x128xbf16>, vector<64x128xbf16>, vector<64x128xbf16>, vector<64x128xbf16>, vector<64x128xbf16> -> vector<576x128xbf16>
    %c0_24 = arith.constant 0 : index
    %c0_25 = arith.constant 0 : index
    %48 = vector.load %arg3[%c0_24, %c0_25] : memref<64x576xbf16, #tpu.memory_space<vmem>>, vector<64x576xbf16>
    %cst_26 = arith.constant dense<0.000000e+00> : vector<64x128xf32>
    %49 = tpu.matmul %48, %47, %cst_26 {dimension_numbers = #tpu.dot_dimension_numbers<[1], [0], [0], [1], [0, 0, 1, 1], [], []>} : vector<64x576xbf16>, vector<576x128xbf16>, vector<64x128xf32> -> vector<64x128xf32>
    %c0_27 = arith.constant 0 : index
    %c0_28 = arith.constant 0 : index
    %50 = vector.load %arg4[%c0_27, %c0_28] : memref<64x1xf32, #tpu.memory_space<vmem>>, vector<64x1xf32>
    %51 = vector.broadcast %50 : vector<64x1xf32> to vector<64x128xf32>
    %52 = arith.addf %49, %51 : vector<64x128xf32>
    %cst_29 = arith.constant 0.000000e+00 : f32
    %53 = vector.broadcast %cst_29 : f32 to vector<64x128xf32>
    %54 = arith.maximumf %52, %53 : vector<64x128xf32>
    %55 = vector.broadcast %20 : vector<1x128xf32> to vector<64x128xf32>
    %56 = arith.mulf %54, %55 : vector<64x128xf32>
    %57 = arith.truncf %56 : vector<64x128xf32> to vector<64x128xbf16>
    %cst_30 = arith.constant 0.000000e+00 : bf16
    %58 = vector.broadcast %cst_30 : bf16 to vector<64x11xbf16>
    %59 = vector.extract_strided_slice %57 {offsets = [0, 0], sizes = [64, 117], strides = [1, 1]} : vector<64x128xbf16> to vector<64x117xbf16>
    %60 = tpu.concatenate %58, %59 in 1 : vector<64x11xbf16>, vector<64x117xbf16> -> vector<64x128xbf16>
    %cst_31 = arith.constant 0.000000e+00 : bf16
    %61 = vector.broadcast %cst_31 : bf16 to vector<64x10xbf16>
    %62 = vector.extract_strided_slice %57 {offsets = [0, 0], sizes = [64, 118], strides = [1, 1]} : vector<64x128xbf16> to vector<64x118xbf16>
    %63 = tpu.concatenate %61, %62 in 1 : vector<64x10xbf16>, vector<64x118xbf16> -> vector<64x128xbf16>
    %cst_32 = arith.constant 0.000000e+00 : bf16
    %64 = vector.broadcast %cst_32 : bf16 to vector<64x9xbf16>
    %65 = vector.extract_strided_slice %57 {offsets = [0, 0], sizes = [64, 119], strides = [1, 1]} : vector<64x128xbf16> to vector<64x119xbf16>
    %66 = tpu.concatenate %64, %65 in 1 : vector<64x9xbf16>, vector<64x119xbf16> -> vector<64x128xbf16>
    %cst_33 = arith.constant 0.000000e+00 : bf16
    %67 = vector.broadcast %cst_33 : bf16 to vector<64x1xbf16>
    %68 = vector.extract_strided_slice %57 {offsets = [0, 0], sizes = [64, 127], strides = [1, 1]} : vector<64x128xbf16> to vector<64x127xbf16>
    %69 = tpu.concatenate %67, %68 in 1 : vector<64x1xbf16>, vector<64x127xbf16> -> vector<64x128xbf16>
    %70 = vector.extract_strided_slice %57 {offsets = [0, 1], sizes = [64, 127], strides = [1, 1]} : vector<64x128xbf16> to vector<64x127xbf16>
    %cst_34 = arith.constant 0.000000e+00 : bf16
    %71 = vector.broadcast %cst_34 : bf16 to vector<64x1xbf16>
    %72 = tpu.concatenate %70, %71 in 1 : vector<64x127xbf16>, vector<64x1xbf16> -> vector<64x128xbf16>
    %73 = vector.extract_strided_slice %57 {offsets = [0, 9], sizes = [64, 119], strides = [1, 1]} : vector<64x128xbf16> to vector<64x119xbf16>
    %cst_35 = arith.constant 0.000000e+00 : bf16
    %74 = vector.broadcast %cst_35 : bf16 to vector<64x9xbf16>
    %75 = tpu.concatenate %73, %74 in 1 : vector<64x119xbf16>, vector<64x9xbf16> -> vector<64x128xbf16>
    %76 = vector.extract_strided_slice %57 {offsets = [0, 10], sizes = [64, 118], strides = [1, 1]} : vector<64x128xbf16> to vector<64x118xbf16>
    %cst_36 = arith.constant 0.000000e+00 : bf16
    %77 = vector.broadcast %cst_36 : bf16 to vector<64x10xbf16>
    %78 = tpu.concatenate %76, %77 in 1 : vector<64x118xbf16>, vector<64x10xbf16> -> vector<64x128xbf16>
    %79 = vector.extract_strided_slice %57 {offsets = [0, 11], sizes = [64, 117], strides = [1, 1]} : vector<64x128xbf16> to vector<64x117xbf16>
    %cst_37 = arith.constant 0.000000e+00 : bf16
    %80 = vector.broadcast %cst_37 : bf16 to vector<64x11xbf16>
    %81 = tpu.concatenate %79, %80 in 1 : vector<64x117xbf16>, vector<64x11xbf16> -> vector<64x128xbf16>
    %82 = tpu.concatenate %60, %63, %66, %69, %57, %72, %75, %78, %81 in 0 : vector<64x128xbf16>, vector<64x128xbf16>, vector<64x128xbf16>, vector<64x128xbf16>, vector<64x128xbf16>, vector<64x128xbf16>, vector<64x128xbf16>, vector<64x128xbf16>, vector<64x128xbf16> -> vector<576x128xbf16>
    %c0_38 = arith.constant 0 : index
    %c0_39 = arith.constant 0 : index
    %83 = vector.load %arg5[%c0_38, %c0_39] : memref<64x576xbf16, #tpu.memory_space<vmem>>, vector<64x576xbf16>
    %cst_40 = arith.constant dense<0.000000e+00> : vector<64x128xf32>
    %84 = tpu.matmul %83, %82, %cst_40 {dimension_numbers = #tpu.dot_dimension_numbers<[1], [0], [0], [1], [0, 0, 1, 1], [], []>} : vector<64x576xbf16>, vector<576x128xbf16>, vector<64x128xf32> -> vector<64x128xf32>
    %c0_41 = arith.constant 0 : index
    %c0_42 = arith.constant 0 : index
    %85 = vector.load %arg6[%c0_41, %c0_42] : memref<64x1xf32, #tpu.memory_space<vmem>>, vector<64x1xf32>
    %86 = vector.broadcast %85 : vector<64x1xf32> to vector<64x128xf32>
    %87 = arith.addf %84, %86 : vector<64x128xf32>
    %cst_43 = arith.constant 0.000000e+00 : f32
    %88 = vector.broadcast %cst_43 : f32 to vector<64x128xf32>
    %89 = arith.maximumf %87, %88 : vector<64x128xf32>
    %90 = vector.broadcast %20 : vector<1x128xf32> to vector<64x128xf32>
    %91 = arith.mulf %89, %90 : vector<64x128xf32>
    %c0_44 = arith.constant 0 : index
    %c0_45 = arith.constant 0 : index
    %92 = vector.load %arg7[%c0_44, %c0_45] : memref<64x1xf32, #tpu.memory_space<vmem>>, vector<64x1xf32>
    %93 = vector.broadcast %92 : vector<64x1xf32> to vector<64x128xf32>
    %94 = arith.mulf %91, %93 : vector<64x128xf32>
    %cst_46 = arith.constant dense<0.000000e+00> : vector<128xf32>
    %95 = vector.multi_reduction <add>, %94, %cst_46 [0] : vector<64x128xf32> to vector<128xf32>
    %96 = vector.shape_cast %95 : vector<128xf32> to vector<1x128xf32>
    %c0_47 = arith.constant 0 : index
    %c0_48 = arith.constant 0 : index
    %97 = vector.load %arg8[%c0_47, %c0_48] : memref<1x1xf32, #tpu.memory_space<vmem>>, vector<1x1xf32>
    %98 = vector.broadcast %97 : vector<1x1xf32> to vector<1x128xf32>
    %99 = arith.addf %96, %98 : vector<1x128xf32>
    %100 = vector.shape_cast %99 : vector<1x128xf32> to vector<1x1x128xf32>
    %c0_49 = arith.constant 0 : index
    %c0_50 = arith.constant 0 : index
    %c0_51 = arith.constant 0 : index
    %101 = vector.load %arg9[%c0_49, %c0_50, %c0_51] : memref<1x1x128xf32, #tpu.memory_space<vmem>>, vector<1x1x128xf32>
    tpu.vector_store %arg9[%c0_49, %c0_50, %c0_51], %100 {strides = array<i32>} : memref<1x1x128xf32, #tpu.memory_space<vmem>>, vector<1x1x128xf32>,
    return
  }
  func.func @transform_0(%arg0: i32) -> (i32, i32) {
    %c0_i32 = arith.constant 0 : i32
    %c0_i32_0 = arith.constant 0 : i32
    %c0_i32_1 = arith.constant 0 : i32
    return %c0_i32, %c0_i32_0 : i32, i32
  }
  func.func @transform_1(%arg0: i32) -> (i32, i32, i32) {
    %c0_i32 = arith.constant 0 : i32
    %c0_i32_0 = arith.constant 0 : i32
    %c0_i32_1 = arith.constant 0 : i32
    return %arg0, %c0_i32, %c0_i32_0 : i32, i32, i32
  }
  func.func @transform_2(%arg0: i32) -> (i32, i32) {
    %c0_i32 = arith.constant 0 : i32
    %c0_i32_0 = arith.constant 0 : i32
    %c0_i32_1 = arith.constant 0 : i32
    return %c0_i32, %c0_i32_0 : i32, i32
  }
  func.func @transform_3(%arg0: i32) -> (i32, i32) {
    %c0_i32 = arith.constant 0 : i32
    %c0_i32_0 = arith.constant 0 : i32
    %c0_i32_1 = arith.constant 0 : i32
    return %c0_i32, %c0_i32_0 : i32, i32
  }
  func.func @transform_4(%arg0: i32) -> (i32, i32) {
    %c0_i32 = arith.constant 0 : i32
    %c0_i32_0 = arith.constant 0 : i32
    %c0_i32_1 = arith.constant 0 : i32
    return %c0_i32, %c0_i32_0 : i32, i32
  }
  func.func @transform_5(%arg0: i32) -> (i32, i32) {
    %c0_i32 = arith.constant 0 : i32
    %c0_i32_0 = arith.constant 0 : i32
    %c0_i32_1 = arith.constant 0 : i32
    return %c0_i32, %c0_i32_0 : i32, i32
  }
  func.func @transform_6(%arg0: i32) -> (i32, i32) {
    %c0_i32 = arith.constant 0 : i32
    %c0_i32_0 = arith.constant 0 : i32
    %c0_i32_1 = arith.constant 0 : i32
    return %c0_i32, %c0_i32_0 : i32, i32
  }
  func.func @transform_7(%arg0: i32) -> (i32, i32) {
    %c0_i32 = arith.constant 0 : i32
    %c0_i32_0 = arith.constant 0 : i32
    %c0_i32_1 = arith.constant 0 : i32
    return %c0_i32, %c0_i32_0 : i32, i32
  }
  func.func @transform_8(%arg0: i32) -> (i32, i32, i32) {
    %c0_i32 = arith.constant 0 : i32
    %c0_i32_0 = arith.constant 0 : i32
    %c0_i32_1 = arith.constant 0 : i32
    return %arg0, %c0_i32, %c0_i32_0 : i32, i32, i32
  }
}

</mosaic_0001>

<llo_original>
// kernel: tpu_custom_call.1
$region0: #{tpu_custom_call.1}
  #allocation0 [shape = 'u32[]', space=smem, size = 0x4, offset = 0x4, fixed_abs, tag = 'smem constant byte address 0x4 - core index']
  #allocation1 [shape = 'u32[144,128]{1,0:T(1,128)}', space=vmem, size = 0x12000, scoped, tag = 'internal scratch']
  #allocation2 [shape = 'f32[64,128]{1,0:T(8,128)}', space=vmem, size = 0x8000, scoped, tag = 'scratch operand']
  #allocation3 [shape = 'f32[1,1]{1,0:T(1,128)S(1)}', space=vmem, size = 0x200, scoped, tag = 'scoped memory for tpu_custom_call.1']
  %s0 = inlined_call_operand.vmem [shape: f32[1,128], index: 0, kind: input, shape index: {}]
  %s1 = inlined_call_operand.hbm [shape: f32[2,64,64], index: 1, kind: input, shape index: {}]
  %s2 = inlined_call_operand.vmem [shape: bf16[64,576], index: 2, kind: input, shape index: {}]
  %s3 = inlined_call_operand.vmem [shape: f32[64,1], index: 3, kind: input, shape index: {}]
  %s4 = inlined_call_operand.hbm [shape: bf16[64,576], index: 4, kind: input, shape index: {}]
  %s5 = inlined_call_operand.vmem [shape: f32[64,1], index: 5, kind: input, shape index: {}]
  %s6 = inlined_call_operand.vmem [shape: f32[64,1], index: 6, kind: input, shape index: {}]
  %s7 = inlined_call_operand.<no memory space> [shape: f32[1,1], index: 7, kind: input, shape index: {}]
  %s8 = inlined_call_operand.hbm [shape: f32[2,1,128], index: 8, kind: output, shape index: {}]
  %s9 = sld [smem:[#allocation0]]
  $region73: #{tpu_custom_call.1} parent=0
    _
  %s11 = ssub.s32 1, %s9
  %s12 = scalar_select 0, %s11, %s9
  %v13 = vstv %s7
  %14 = vst [vmem:[#allocation3] sm:$0x1] %v13
  $region1: #{tpu_custom_call.1} parent=0
    #allocation4 [shape = 'u8[65536]{0}', space=vmem, size = 0x10000, scoped, tag = 'input window, operand 1']
    #allocation5 [shape = 's32[2]{0}', space=sflag, size = 0x8, scoped, tag = 'scoped memory for tpu_custom_call.1']
    #allocation6 [shape = 's32[2]{0}', space=sflag, size = 0x8, scoped, tag = 'scoped memory for tpu_custom_call.1']
    #allocation7 [shape = 'u8[81920]{0}', space=vmem, size = 0x14000, scoped, tag = 'input window, operand 4, single buffered']
    #allocation8 [shape = 's32[1]{0}', space=sflag, size = 0x4, scoped, tag = 'scoped memory for tpu_custom_call.1']
    #allocation9 [shape = 'u8[1024]{0}', space=vmem, size = 0x400, scoped, tag = 'output window, operand 0']
    %15 = vsyncpa [#allocation5], 0
    %s16 = scalar_lea.sflag [#allocation5], 1
    %17 = vsyncpa %s16, 0
    %18 = vsyncpa [#allocation8], 0
    %19 = vsyncpa [#allocation6], 0
    %s20 = scalar_lea.sflag [#allocation6], 1
    %21 = vsyncpa %s20, 0
    loop: start=0, step=1, limit=4
    $region2: #{tpu_custom_call.1} parent=1 // loop_pre_header
      _
    $region3: #{tpu_custom_call.1} parent=1 // loop_header
      %s23 = sphi 0, %s27
      %p24 = scmp.ge.s32.totalorder %s23, 4
      %s31 = sphi 0, %s31
      %s33 = sphi 0, %s31
      %s34 = sphi 0, %s33
      %s48 = sphi 0, %s34
      %s54 = sphi 0, %s56
      %s57 = sphi 0, %s54
      %s58 = sphi 0, %s57
      %s74 = sphi 0, %s58
      %s78 = sphi 0, %s78
      %s80 = sphi 0, %s78
      %s81 = sphi 0, %s80
      %s95 = sphi 0, %s81
      %s99 = sphi 0, %s99
      %s101 = sphi 0, %s99
      %s102 = sphi 0, %s101
      %s116 = sphi 0, %s102
      %s120 = sphi 0, %s120
      %s122 = sphi 0, %s120
      %s123 = sphi 0, %s122
      %s137 = sphi 0, %s123
      %s141 = sphi 0, %s141
      %s143 = sphi 0, %s141
      %s144 = sphi 0, %s143
      %s158 = sphi 0, %s144
      %s162 = sphi 0, %s162
      %s164 = sphi 0, %s162
      %s165 = sphi 0, %s164
      %s179 = sphi 0, %s165
      %s183 = sphi 0, %s183
      %s185 = sphi 0, %s183
      %s186 = sphi 0, %s185
      %s200 = sphi 0, %s186
      %s206 = sphi 0, %s208
      %s209 = sphi 0, %s206
      %s210 = sphi 0, %s209
      %s226 = sphi 0, %s210
    $region4: #{tpu_custom_call.1} parent=1 // loop_header_branch
      %26 = sbr.rel (%p24) target = $region8
    $region5: #{tpu_custom_call.1} parent=1 // loop_body
      %s28 = ssub.s32 %s23, 1
      %s29 = ssub.s32 %s23, 2
      %s30 = sadd.s32 %s23, 1
      %s32 = sadd.s32 %s31, 1
      %p35 = scmp.eq.s32.totalorder %s23, 1
      %p36 = scmp.ne.s32.totalorder %s31, %s33
      %p37 = scmp.eq.s32.totalorder %s23, 0
      %p38 = por %p36, %p37
      %p39 = scmp.ne.s32.totalorder %s31, %s33
      %p40 = scmp.eq.s32.totalorder %s28, 1
      %p41 = por %p39, %p40
      %p42 = scmp.ne.s32.totalorder %s33, %s34
      %p43 = scmp.eq.s32.totalorder %s28, 0
      %p44 = por %p42, %p43
      %p45 = scmp.ne.s32.totalorder %s33, %s34
      %p46 = scmp.eq.s32.totalorder %s29, 1
      %p47 = por %p45, %p46
      %p49 = scmp.ne.s32.totalorder %s34, %s48
      %p50 = scmp.eq.s32.totalorder %s29, 0
      %p51 = por %p49, %p50
      %s52 = ssub.s32 %s23, %s30
      %p53 = scmp.eq.s32.totalorder %s52, 0
      %s55 = sadd.s32 %s54, 1
      %s56 = scalar_select %p53, %s54, %s55
      %p59 = pneg %p53
      %p60 = scmp.eq.s32.totalorder %s23, 1
      %p61 = por %p59, %p60
      %p62 = scmp.ne.s32.totalorder %s54, %s57
      %p63 = scmp.eq.s32.totalorder %s23, 0
      %p64 = por %p62, %p63
      %p65 = scmp.ne.s32.totalorder %s54, %s57
      %p66 = scmp.eq.s32.totalorder %s28, 1
      %p67 = por %p65, %p66
      %p68 = scmp.ne.s32.totalorder %s57, %s58
      %p69 = scmp.eq.s32.totalorder %s28, 0
      %p70 = por %p68, %p69
      %p71 = scmp.ne.s32.totalorder %s57, %s58
      %p72 = scmp.eq.s32.totalorder %s29, 1
      %p73 = por %p71, %p72
      %p75 = scmp.ne.s32.totalorder %s58, %s74
      %p76 = scmp.eq.s32.totalorder %s29, 0
      %p77 = por %p75, %p76
      %s79 = sadd.s32 %s78, 1
      %p82 = scmp.eq.s32.totalorder %s23, 1
      %p83 = scmp.ne.s32.totalorder %s78, %s80
      %p84 = scmp.eq.s32.totalorder %s23, 0
      %p85 = por %p83, %p84
      %p86 = scmp.ne.s32.totalorder %s78, %s80
      %p87 = scmp.eq.s32.totalorder %s28, 1
      %p88 = por %p86, %p87
      %p89 = scmp.ne.s32.totalorder %s80, %s81
      %p90 = scmp.eq.s32.totalorder %s28, 0
      %p91 = por %p89, %p90
      %p92 = scmp.ne.s32.totalorder %s80, %s81
      %p93 = scmp.eq.s32.totalorder %s29, 1
      %p94 = por %p92, %p93
      %p96 = scmp.ne.s32.totalorder %s81, %s95
      %p97 = scmp.eq.s32.totalorder %s29, 0
      %p98 = por %p96, %p97
      %s100 = sadd.s32 %s99, 1
      %p103 = scmp.eq.s32.totalorder %s23, 1
      %p104 = scmp.ne.s32.totalorder %s99, %s101
      %p105 = scmp.eq.s32.totalorder %s23, 0
      %p106 = por %p104, %p105
      %p107 = scmp.ne.s32.totalorder %s99, %s101
      %p108 = scmp.eq.s32.totalorder %s28, 1
      %p109 = por %p107, %p108
      %p110 = scmp.ne.s32.totalorder %s101, %s102
      %p111 = scmp.eq.s32.totalorder %s28, 0
      %p112 = por %p110, %p111
      %p113 = scmp.ne.s32.totalorder %s101, %s102
      %p114 = scmp.eq.s32.totalorder %s29, 1
      %p115 = por %p113, %p114
      %p117 = scmp.ne.s32.totalorder %s102, %s116
      %p118 = scmp.eq.s32.totalorder %s29, 0
      %p119 = por %p117, %p118
      %s121 = sadd.s32 %s120, 1
      %p124 = scmp.eq.s32.totalorder %s23, 1
      %p125 = scmp.ne.s32.totalorder %s120, %s122
      %p126 = scmp.eq.s32.totalorder %s23, 0
      %p127 = por %p125, %p126
      %p128 = scmp.ne.s32.totalorder %s120, %s122
      %p129 = scmp.eq.s32.totalorder %s28, 1
      %p130 = por %p128, %p129
      %p131 = scmp.ne.s32.totalorder %s122, %s123
      %p132 = scmp.eq.s32.totalorder %s28, 0
      %p133 = por %p131, %p132
      %p134 = scmp.ne.s32.totalorder %s122, %s123
      %p135 = scmp.eq.s32.totalorder %s29, 1
      %p136 = por %p134, %p135
      %p138 = scmp.ne.s32.totalorder %s123, %s137
      %p139 = scmp.eq.s32.totalorder %s29, 0
      %p140 = por %p138, %p139
      %s142 = sadd.s32 %s141, 1
      %p145 = scmp.eq.s32.totalorder %s23, 1
      %p146 = scmp.ne.s32.totalorder %s141, %s143
      %p147 = scmp.eq.s32.totalorder %s23, 0
      %p148 = por %p146, %p147
      %p149 = scmp.ne.s32.totalorder %s141, %s143
      %p150 = scmp.eq.s32.totalorder %s28, 1
      %p151 = por %p149, %p150
      %p152 = scmp.ne.s32.totalorder %s143, %s144
      %p153 = scmp.eq.s32.totalorder %s28, 0
      %p154 = por %p152, %p153
      %p155 = scmp.ne.s32.totalorder %s143, %s144
      %p156 = scmp.eq.s32.totalorder %s29, 1
      %p157 = por %p155, %p156
      %p159 = scmp.ne.s32.totalorder %s144, %s158
      %p160 = scmp.eq.s32.totalorder %s29, 0
      %p161 = por %p159, %p160
      %s163 = sadd.s32 %s162, 1
      %p166 = scmp.eq.s32.totalorder %s23, 1
      %p167 = scmp.ne.s32.totalorder %s162, %s164
      %p168 = scmp.eq.s32.totalorder %s23, 0
      %p169 = por %p167, %p168
      %p170 = scmp.ne.s32.totalorder %s162, %s164
      %p171 = scmp.eq.s32.totalorder %s28, 1
      %p172 = por %p170, %p171
      %p173 = scmp.ne.s32.totalorder %s164, %s165
      %p174 = scmp.eq.s32.totalorder %s28, 0
      %p175 = por %p173, %p174
      %p176 = scmp.ne.s32.totalorder %s164, %s165
      %p177 = scmp.eq.s32.totalorder %s29, 1
      %p178 = por %p176, %p177
      %p180 = scmp.ne.s32.totalorder %s165, %s179
      %p181 = scmp.eq.s32.totalorder %s29, 0
      %p182 = por %p180, %p181
      %s184 = sadd.s32 %s183, 1
      %p187 = scmp.eq.s32.totalorder %s23, 1
      %p188 = scmp.ne.s32.totalorder %s183, %s185
      %p189 = scmp.eq.s32.totalorder %s23, 0
      %p190 = por %p188, %p189
      %p191 = scmp.ne.s32.totalorder %s183, %s185
      %p192 = scmp.eq.s32.totalorder %s28, 1
      %p193 = por %p191, %p192
      %p194 = scmp.ne.s32.totalorder %s185, %s186
      %p195 = scmp.eq.s32.totalorder %s28, 0
      %p196 = por %p194, %p195
      %p197 = scmp.ne.s32.totalorder %s185, %s186
      %p198 = scmp.eq.s32.totalorder %s29, 1
      %p199 = por %p197, %p198
      %p201 = scmp.ne.s32.totalorder %s186, %s200
      %p202 = scmp.eq.s32.totalorder %s29, 0
      %p203 = por %p201, %p202
      %s204 = ssub.s32 %s23, %s30
      %p205 = scmp.eq.s32.totalorder %s204, 0
      %s207 = sadd.s32 %s206, 1
      %s208 = scalar_select %p205, %s206, %s207
      %p211 = pneg %p205
      %p212 = scmp.eq.s32.totalorder %s23, 1
      %p213 = por %p211, %p212
      %p214 = scmp.ne.s32.totalorder %s206, %s209
      %p215 = scmp.eq.s32.totalorder %s23, 0
      %p216 = por %p214, %p215
      %p217 = scmp.ne.s32.totalorder %s206, %s209
      %p218 = scmp.eq.s32.totalorder %s28, 1
      %p219 = por %p217, %p218
      %p220 = scmp.ne.s32.totalorder %s209, %s210
      %p221 = scmp.eq.s32.totalorder %s28, 0
      %p222 = por %p220, %p221
      %p223 = scmp.ne.s32.totalorder %s209, %s210
      %p224 = scmp.eq.s32.totalorder %s29, 1
      %p225 = por %p223, %p224
      %p227 = scmp.ne.s32.totalorder %s210, %s226
      %p228 = scmp.eq.s32.totalorder %s29, 0
      %p229 = por %p227, %p228
      %p230 = scmp.le.s32.totalorder 1, %s23
      %p231 = scmp.lt.s32.totalorder %s23, 3
      %p232 = pnand %p230, %p231
      %p233 = pneg %p232
      // Predicated region
      $region9: #{tpu_custom_call.1} parent=5 // pred_check
        _
      $region10: #{tpu_custom_call.1} parent=5 // pred_check_branch
        %235 = sbr.rel (%p232) target = $region12
      $region11: #{tpu_custom_call.1} parent=5 // pred_region
        %s236 = ssub.s32 %s23, 1
        // Predicated region
        $region13: #{tpu_custom_call.1} parent=11 // pred_check
          %p237 = pneg %p44
        $region14: #{tpu_custom_call.1} parent=11 // pred_check_branch
          %239 = sbr.rel (%p237) target = $region16
        $region15: #{tpu_custom_call.1} parent=11 // pred_region
          _
        $region16: #{tpu_custom_call.1} parent=11 // pred_fallthru
          _
        // Predicated region
        $region17: #{tpu_custom_call.1} parent=11 // pred_check
          %p240 = pneg %p91
        $region18: #{tpu_custom_call.1} parent=11 // pred_check_branch
          %242 = sbr.rel (%p240) target = $region20
        $region19: #{tpu_custom_call.1} parent=11 // pred_region
          _
        $region20: #{tpu_custom_call.1} parent=11 // pred_fallthru
          _
        // Predicated region
        $region21: #{tpu_custom_call.1} parent=11 // pred_check
          %p243 = pneg %p112
        $region22: #{tpu_custom_call.1} parent=11 // pred_check_branch
          %245 = sbr.rel (%p243) target = $region24
        $region23: #{tpu_custom_call.1} parent=11 // pred_region
          _
        $region24: #{tpu_custom_call.1} parent=11 // pred_fallthru
          _
        // Predicated region
        $region25: #{tpu_custom_call.1} parent=11 // pred_check
          %p246 = pneg %p133
        $region26: #{tpu_custom_call.1} parent=11 // pred_check_branch
          %248 = sbr.rel (%p246) target = $region28
        $region27: #{tpu_custom_call.1} parent=11 // pred_region
          %s250 = ssub.s32 2560, 2560
          %251 = vsyncadd [#allocation8], %s250
          %s252 = sshll.u32 [#allocation7], 4
          %s253 = int_to_ptr.vmem [resolvable:$true] %s252
          %258 = dma.hbm_to_vmem [thread:$0]  %s4, 2560, %s253, [#allocation8], 320, 320, 20
        $region28: #{tpu_custom_call.1} parent=11 // pred_fallthru
          _
        // Predicated region
        $region29: #{tpu_custom_call.1} parent=11 // pred_check
          %p259 = pneg %p154
        $region30: #{tpu_custom_call.1} parent=11 // pred_check_branch
          %261 = sbr.rel (%p259) target = $region32
        $region31: #{tpu_custom_call.1} parent=11 // pred_region
          _
        $region32: #{tpu_custom_call.1} parent=11 // pred_fallthru
          _
        // Predicated region
        $region33: #{tpu_custom_call.1} parent=11 // pred_check
          %p262 = pneg %p175
        $region34: #{tpu_custom_call.1} parent=11 // pred_check_branch
          %264 = sbr.rel (%p262) target = $region36
        $region35: #{tpu_custom_call.1} parent=11 // pred_region
          _
        $region36: #{tpu_custom_call.1} parent=11 // pred_fallthru
          _
        // Predicated region
        $region37: #{tpu_custom_call.1} parent=11 // pred_check
          %p265 = pneg %p196
        $region38: #{tpu_custom_call.1} parent=11 // pred_check_branch
          %267 = sbr.rel (%p265) target = $region40
        $region39: #{tpu_custom_call.1} parent=11 // pred_region
          _
        $region40: #{tpu_custom_call.1} parent=11 // pred_fallthru
          _
      $region12: #{tpu_custom_call.1} parent=5 // pred_fallthru
        _
      %p268 = scmp.lt.s32.totalorder %s23, 2
      // Predicated region
      $region41: #{tpu_custom_call.1} parent=5 // pred_check
        %p269 = pneg %p268
      $region42: #{tpu_custom_call.1} parent=5 // pred_check_branch
        %271 = sbr.rel (%p269) target = $region44
      $region43: #{tpu_custom_call.1} parent=5 // pred_region
        // Predicated region
        $region45: #{tpu_custom_call.1} parent=43 // pred_check
          %p272 = pneg %p64
        $region46: #{tpu_custom_call.1} parent=43 // pred_check_branch
          %274 = sbr.rel (%p272) target = $region48
        $region47: #{tpu_custom_call.1} parent=43 // pred_region
          %s275 = sand.u32 %s54, 1
          %s276 = scalar_lea.sflag [#allocation5], %s275
          %s277 = sand.u32 %s54, 1
          %s278 = smul.addr %s277, 64
          %s279 = scalar_lea.vmem [#allocation4], %s278
          %s281 = ssub.s32 1024, 1024
          %282 = vsyncadd %s276, %s281
          %s283 = smul.addr %s23, 8
          %s284 = smul.addr %s283, 128
          %s285 = scalar_lea.hbm %s1, %s284
          %s286 = sshll.u32 %s279, 4
          %s287 = int_to_ptr.vmem [resolvable:$true] %s286
          %292 = dma.hbm_to_vmem [thread:$0]  %s285, 1024, %s287, %s276, 128, 128, 8
        $region48: #{tpu_custom_call.1} parent=43 // pred_fallthru
          _
      $region44: #{tpu_custom_call.1} parent=5 // pred_fallthru
        _
      %p293 = scmp.le.s32.totalorder 1, %s23
      %p294 = scmp.lt.s32.totalorder %s23, 3
      %p295 = pnand %p293, %p294
      %p296 = pneg %p295
      // Predicated region
      $region49: #{tpu_custom_call.1} parent=5 // pred_check
        _
      $region50: #{tpu_custom_call.1} parent=5 // pred_check_branch
        %298 = sbr.rel (%p295) target = $region52
      $region51: #{tpu_custom_call.1} parent=5 // pred_region
        %s299 = ssub.s32 %s23, 1
        %s300 = sand.u32 %s57, 1
        %s301 = scalar_lea.sflag [#allocation5], %s300
        %s302 = sand.u32 %s57, 1
        %s303 = smul.addr %s302, 64
        %s304 = scalar_lea.vmem [#allocation4], %s303
        // Predicated region
        $region53: #{tpu_custom_call.1} parent=51 // pred_check
          %p305 = pneg %p70
        $region54: #{tpu_custom_call.1} parent=51 // pred_check_branch
          %307 = sbr.rel (%p305) target = $region56
        $region55: #{tpu_custom_call.1} parent=51 // pred_region
          %308 = dma.done %s301, 1024
        $region56: #{tpu_custom_call.1} parent=51 // pred_fallthru
          _
        // Predicated region
        $region57: #{tpu_custom_call.1} parent=51 // pred_check
          %p309 = pneg %p133
        $region58: #{tpu_custom_call.1} parent=51 // pred_check_branch
          %311 = sbr.rel (%p309) target = $region60
        $region59: #{tpu_custom_call.1} parent=51 // pred_region
          %312 = dma.done [#allocation8], 2560
        $region60: #{tpu_custom_call.1} parent=51 // pred_fallthru
          _
        %p313 = pneg %p44
        %p314 = pneg %p41
        %s315 = sand.u32 %s57, 1
        %s316 = scalar_lea.sflag [#allocation5], %s315
        %s317 = sand.u32 %s57, 1
        %s318 = smul.addr %s317, 64
        %s319 = scalar_lea.vmem [#allocation4], %s318
        %p320 = pneg %p70
        %p321 = pneg %p67
        %p322 = pneg %p91
        %p323 = pneg %p88
        %p324 = pneg %p112
        %p325 = pneg %p109
        %p326 = pneg %p133
        %p327 = pneg %p130
        %p328 = pneg %p154
        %p329 = pneg %p151
        %p330 = pneg %p175
        %p331 = pneg %p172
        %p332 = pneg %p196
        %p333 = pneg %p193
        %p334 = pneg %p222
        %p335 = pneg %p219
        %s336 = sand.u32 %s209, 1
        %s337 = scalar_lea.sflag [#allocation6], %s336
        %s338 = sand.u32 %s209, 1
        %s339 = scalar_lea.vmem [#allocation9], %s338
        %341 = vst [vmem:[#allocation2] sm:$0xff] 0.0
        %342 = vst [vmem:[#allocation2 + $0x8] sm:$0xff] 0.0
        %343 = vst [vmem:[#allocation2 + $0x10] sm:$0xff] 0.0
        %344 = vst [vmem:[#allocation2 + $0x18] sm:$0xff] 0.0
        %345 = vst [vmem:[#allocation2 + $0x20] sm:$0xff] 0.0
        %346 = vst [vmem:[#allocation2 + $0x28] sm:$0xff] 0.0
        %347 = vst [vmem:[#allocation2 + $0x30] sm:$0xff] 0.0
        %348 = vst [vmem:[#allocation2 + $0x38] sm:$0xff] 0.0
        %v349 = vld [vmem:[%s304] sm:$0xff]
        %v350 = vld [vmem:[%s304 + $0x8] sm:$0xff]
        %v351 = vld [vmem:[%s304 + $0x10] sm:$0xff]
        %v352 = vld [vmem:[%s304 + $0x18] sm:$0xff]
        %v353 = vld [vmem:[%s304 + $0x20] sm:$0xff]
        %v354 = vld [vmem:[%s304 + $0x28] sm:$0xff]
        %v355 = vld [vmem:[%s304 + $0x30] sm:$0xff]
        %v356 = vld [vmem:[%s304 + $0x38] sm:$0xff]
        %365 = vrot.lane.b32.xlu0 %v349, 11
        %v366 = vpop.permute.xlu0 %365
        %367 = vrot.lane.b32.xlu0 %v350, 11
        %v368 = vpop.permute.xlu0 %367
        %369 = vrot.lane.b32.xlu0 %v351, 11
        %v370 = vpop.permute.xlu0 %369
        %371 = vrot.lane.b32.xlu0 %v352, 11
        %v372 = vpop.permute.xlu0 %371
        %373 = vrot.lane.b32.xlu0 %v353, 11
        %v374 = vpop.permute.xlu0 %373
        %375 = vrot.lane.b32.xlu0 %v354, 11
        %v376 = vpop.permute.xlu0 %375
        %377 = vrot.lane.b32.xlu0 %v355, 11
        %v378 = vpop.permute.xlu0 %377
        %379 = vrot.lane.b32.xlu0 %v356, 11
        %v380 = vpop.permute.xlu0 %379
        %vm389 = vcmask 154712
        %390 = vst.msk [vmem:[#allocation2] sm:$0xff] %vm389, %v366
        %391 = vst.msk [vmem:[#allocation2 + $0x8] sm:$0xff] %vm389, %v368
        %392 = vst.msk [vmem:[#allocation2 + $0x10] sm:$0xff] %vm389, %v370
        %393 = vst.msk [vmem:[#allocation2 + $0x18] sm:$0xff] %vm389, %v372
        %394 = vst.msk [vmem:[#allocation2 + $0x20] sm:$0xff] %vm389, %v374
        %395 = vst.msk [vmem:[#allocation2 + $0x28] sm:$0xff] %vm389, %v376
        %396 = vst.msk [vmem:[#allocation2 + $0x30] sm:$0xff] %vm389, %v378
        %397 = vst.msk [vmem:[#allocation2 + $0x38] sm:$0xff] %vm389, %v380
        %398 = vrot.lane.b32.xlu0 %v349, 13
        %v399 = vpop.permute.xlu0 %398
        %400 = vrot.lane.b32.xlu0 %v350, 13
        %v401 = vpop.permute.xlu0 %400
        %402 = vrot.lane.b32.xlu0 %v351, 13
        %v403 = vpop.permute.xlu0 %402
        %404 = vrot.lane.b32.xlu0 %v352, 13
        %v405 = vpop.permute.xlu0 %404
        %406 = vrot.lane.b32.xlu0 %v353, 13
        %v407 = vpop.permute.xlu0 %406
        %408 = vrot.lane.b32.xlu0 %v354, 13
        %v409 = vpop.permute.xlu0 %408
        %410 = vrot.lane.b32.xlu0 %v355, 13
        %v411 = vpop.permute.xlu0 %410
        %412 = vrot.lane.b32.xlu0 %v356, 13
        %v413 = vpop.permute.xlu0 %412
        %vm422 = vcmask 236712
        %423 = vst.msk [vmem:[#allocation2] sm:$0xff] %vm422, %v399
        %424 = vst.msk [vmem:[#allocation2 + $0x8] sm:$0xff] %vm422, %v401
        %425 = vst.msk [vmem:[#allocation2 + $0x10] sm:$0xff] %vm422, %v403
        %426 = vst.msk [vmem:[#allocation2 + $0x18] sm:$0xff] %vm422, %v405
        %427 = vst.msk [vmem:[#allocation2 + $0x20] sm:$0xff] %vm422, %v407
        %428 = vst.msk [vmem:[#allocation2 + $0x28] sm:$0xff] %vm422, %v409
        %429 = vst.msk [vmem:[#allocation2 + $0x30] sm:$0xff] %vm422, %v411
        %430 = vst.msk [vmem:[#allocation2 + $0x38] sm:$0xff] %vm422, %v413
        %431 = vrot.lane.b32.xlu0 %v349, 15
        %v432 = vpop.permute.xlu0 %431
        %433 = vrot.lane.b32.xlu0 %v350, 15
        %v434 = vpop.permute.xlu0 %433
        %435 = vrot.lane.b32.xlu0 %v351, 15
        %v436 = vpop.permute.xlu0 %435
        %437 = vrot.lane.b32.xlu0 %v352, 15
        %v438 = vpop.permute.xlu0 %437
        %439 = vrot.lane.b32.xlu0 %v353, 15
        %v440 = vpop.permute.xlu0 %439
        %441 = vrot.lane.b32.xlu0 %v354, 15
        %v442 = vpop.permute.xlu0 %441
        %443 = vrot.lane.b32.xlu0 %v355, 15
        %v444 = vpop.permute.xlu0 %443
        %445 = vrot.lane.b32.xlu0 %v356, 15
        %v446 = vpop.permute.xlu0 %445
        %vm455 = vcmask 318712
        %456 = vst.msk [vmem:[#allocation2] sm:$0xff] %vm455, %v432
        %457 = vst.msk [vmem:[#allocation2 + $0x8] sm:$0xff] %vm455, %v434
        %458 = vst.msk [vmem:[#allocation2 + $0x10] sm:$0xff] %vm455, %v436
        %459 = vst.msk [vmem:[#allocation2 + $0x18] sm:$0xff] %vm455, %v438
        %460 = vst.msk [vmem:[#allocation2 + $0x20] sm:$0xff] %vm455, %v440
        %461 = vst.msk [vmem:[#allocation2 + $0x28] sm:$0xff] %vm455, %v442
        %462 = vst.msk [vmem:[#allocation2 + $0x30] sm:$0xff] %vm455, %v444
        %463 = vst.msk [vmem:[#allocation2 + $0x38] sm:$0xff] %vm455, %v446
        %464 = vrot.lane.b32.xlu0 %v349, 17
        %v465 = vpop.permute.xlu0 %464
        %466 = vrot.lane.b32.xlu0 %v350, 17
        %v467 = vpop.permute.xlu0 %466
        %468 = vrot.lane.b32.xlu0 %v351, 17
        %v469 = vpop.permute.xlu0 %468
        %470 = vrot.lane.b32.xlu0 %v352, 17
        %v471 = vpop.permute.xlu0 %470
        %472 = vrot.lane.b32.xlu0 %v353, 17
        %v473 = vpop.permute.xlu0 %472
        %474 = vrot.lane.b32.xlu0 %v354, 17
        %v475 = vpop.permute.xlu0 %474
        %476 = vrot.lane.b32.xlu0 %v355, 17
        %v477 = vpop.permute.xlu0 %476
        %478 = vrot.lane.b32.xlu0 %v356, 17
        %v479 = vpop.permute.xlu0 %478
        %vm488 = vcmask 400712
        %489 = vst.msk [vmem:[#allocation2] sm:$0xff] %vm488, %v465
        %490 = vst.msk [vmem:[#allocation2 + $0x8] sm:$0xff] %vm488, %v467
        %491 = vst.msk [vmem:[#allocation2 + $0x10] sm:$0xff] %vm488, %v469
        %492 = vst.msk [vmem:[#allocation2 + $0x18] sm:$0xff] %vm488, %v471
        %493 = vst.msk [vmem:[#allocation2 + $0x20] sm:$0xff] %vm488, %v473
        %494 = vst.msk [vmem:[#allocation2 + $0x28] sm:$0xff] %vm488, %v475
        %495 = vst.msk [vmem:[#allocation2 + $0x30] sm:$0xff] %vm488, %v477
        %496 = vst.msk [vmem:[#allocation2 + $0x38] sm:$0xff] %vm488, %v479
        %497 = vrot.lane.b32.xlu0 %v349, 19
        %v498 = vpop.permute.xlu0 %497
        %499 = vrot.lane.b32.xlu0 %v350, 19
        %v500 = vpop.permute.xlu0 %499
        %501 = vrot.lane.b32.xlu0 %v351, 19
        %v502 = vpop.permute.xlu0 %501
        %503 = vrot.lane.b32.xlu0 %v352, 19
        %v504 = vpop.permute.xlu0 %503
        %505 = vrot.lane.b32.xlu0 %v353, 19
        %v506 = vpop.permute.xlu0 %505
        %507 = vrot.lane.b32.xlu0 %v354, 19
        %v508 = vpop.permute.xlu0 %507
        %509 = vrot.lane.b32.xlu0 %v355, 19
        %v510 = vpop.permute.xlu0 %509
        %511 = vrot.lane.b32.xlu0 %v356, 19
        %v512 = vpop.permute.xlu0 %511
        %vm521 = vcmask 482712
        %522 = vst.msk [vmem:[#allocation2] sm:$0xff] %vm521, %v498
        %523 = vst.msk [vmem:[#allocation2 + $0x8] sm:$0xff] %vm521, %v500
        %524 = vst.msk [vmem:[#allocation2 + $0x10] sm:$0xff] %vm521, %v502
        %525 = vst.msk [vmem:[#allocation2 + $0x18] sm:$0xff] %vm521, %v504
        %526 = vst.msk [vmem:[#allocation2 + $0x20] sm:$0xff] %vm521, %v506
        %527 = vst.msk [vmem:[#allocation2 + $0x28] sm:$0xff] %vm521, %v508
        %528 = vst.msk [vmem:[#allocation2 + $0x30] sm:$0xff] %vm521, %v510
        %529 = vst.msk [vmem:[#allocation2 + $0x38] sm:$0xff] %vm521, %v512
        %530 = vrot.lane.b32.xlu0 %v349, 21
        %v531 = vpop.permute.xlu0 %530
        %532 = vrot.lane.b32.xlu0 %v350, 21
        %v533 = vpop.permute.xlu0 %532
        %534 = vrot.lane.b32.xlu0 %v351, 21
        %v535 = vpop.permute.xlu0 %534
        %536 = vrot.lane.b32.xlu0 %v352, 21
        %v537 = vpop.permute.xlu0 %536
        %538 = vrot.lane.b32.xlu0 %v353, 21
        %v539 = vpop.permute.xlu0 %538
        %540 = vrot.lane.b32.xlu0 %v354, 21
        %v541 = vpop.permute.xlu0 %540
        %542 = vrot.lane.b32.xlu0 %v355, 21
        %v543 = vpop.permute.xlu0 %542
        %544 = vrot.lane.b32.xlu0 %v356, 21
        %v545 = vpop.permute.xlu0 %544
        %vm554 = vcmask 564712
        %555 = vst.msk [vmem:[#allocation2] sm:$0xff] %vm554, %v531
        %556 = vst.msk [vmem:[#allocation2 + $0x8] sm:$0xff] %vm554, %v533
        %557 = vst.msk [vmem:[#allocation2 + $0x10] sm:$0xff] %vm554, %v535
        %558 = vst.msk [vmem:[#allocation2 + $0x18] sm:$0xff] %vm554, %v537
        %559 = vst.msk [vmem:[#allocation2 + $0x20] sm:$0xff] %vm554, %v539
        %560 = vst.msk [vmem:[#allocation2 + $0x28] sm:$0xff] %vm554, %v541
        %561 = vst.msk [vmem:[#allocation2 + $0x30] sm:$0xff] %vm554, %v543
        %562 = vst.msk [vmem:[#allocation2 + $0x38] sm:$0xff] %vm554, %v545
        %563 = vrot.lane.b32.xlu0 %v349, 23
        %v564 = vpop.permute.xlu0 %563
        %565 = vrot.lane.b32.xlu0 %v350, 23
        %v566 = vpop.permute.xlu0 %565
        %567 = vrot.lane.b32.xlu0 %v351, 23
        %v568 = vpop.permute.xlu0 %567
        %569 = vrot.lane.b32.xlu0 %v352, 23
        %v570 = vpop.permute.xlu0 %569
        %571 = vrot.lane.b32.xlu0 %v353, 23
        %v572 = vpop.permute.xlu0 %571
        %573 = vrot.lane.b32.xlu0 %v354, 23
        %v574 = vpop.permute.xlu0 %573
        %575 = vrot.lane.b32.xlu0 %v355, 23
        %v576 = vpop.permute.xlu0 %575
        %577 = vrot.lane.b32.xlu0 %v356, 23
        %v578 = vpop.permute.xlu0 %577
        %vm587 = vcmask 646712
        %588 = vst.msk [vmem:[#allocation2] sm:$0xff] %vm587, %v564
        %589 = vst.msk [vmem:[#allocation2 + $0x8] sm:$0xff] %vm587, %v566
        %590 = vst.msk [vmem:[#allocation2 + $0x10] sm:$0xff] %vm587, %v568
        %591 = vst.msk [vmem:[#allocation2 + $0x18] sm:$0xff] %vm587, %v570
        %592 = vst.msk [vmem:[#allocation2 + $0x20] sm:$0xff] %vm587, %v572
        %593 = vst.msk [vmem:[#allocation2 + $0x28] sm:$0xff] %vm587, %v574
        %594 = vst.msk [vmem:[#allocation2 + $0x30] sm:$0xff] %vm587, %v576
        %595 = vst.msk [vmem:[#allocation2 + $0x38] sm:$0xff] %vm587, %v578
        %596 = vrot.lane.b32.xlu0 %v349, 25
        %v597 = vpop.permute.xlu0 %596
        %598 = vrot.lane.b32.xlu0 %v350, 25
        %v599 = vpop.permute.xlu0 %598
        %600 = vrot.lane.b32.xlu0 %v351, 25
        %v601 = vpop.permute.xlu0 %600
        %602 = vrot.lane.b32.xlu0 %v352, 25
        %v603 = vpop.permute.xlu0 %602
        %604 = vrot.lane.b32.xlu0 %v353, 25
        %v605 = vpop.permute.xlu0 %604
        %606 = vrot.lane.b32.xlu0 %v354, 25
        %v607 = vpop.permute.xlu0 %606
        %608 = vrot.lane.b32.xlu0 %v355, 25
        %v609 = vpop.permute.xlu0 %608
        %610 = vrot.lane.b32.xlu0 %v356, 25
        %v611 = vpop.permute.xlu0 %610
        %vm620 = vcmask 728712
        %621 = vst.msk [vmem:[#allocation2] sm:$0xff] %vm620, %v597
        %622 = vst.msk [vmem:[#allocation2 + $0x8] sm:$0xff] %vm620, %v599
        %623 = vst.msk [vmem:[#allocation2 + $0x10] sm:$0xff] %vm620, %v601
        %624 = vst.msk [vmem:[#allocation2 + $0x18] sm:$0xff] %vm620, %v603
        %625 = vst.msk [vmem:[#allocation2 + $0x20] sm:$0xff] %vm620, %v605
        %626 = vst.msk [vmem:[#allocation2 + $0x28] sm:$0xff] %vm620, %v607
        %627 = vst.msk [vmem:[#allocation2 + $0x30] sm:$0xff] %vm620, %v609
        %628 = vst.msk [vmem:[#allocation2 + $0x38] sm:$0xff] %vm620, %v611
        %v629 = vld [vmem:[%s0] sm:$0x1]
        %v630 = vld [vmem:[#allocation2] sm:$0xff]
        %v631 = vld [vmem:[#allocation2 + $0x8] sm:$0xff]
        %v632 = vld [vmem:[#allocation2 + $0x10] sm:$0xff]
        %v633 = vld [vmem:[#allocation2 + $0x18] sm:$0xff]
        %v634 = vld [vmem:[#allocation2 + $0x20] sm:$0xff]
        %v635 = vld [vmem:[#allocation2 + $0x28] sm:$0xff]
        %v636 = vld [vmem:[#allocation2 + $0x30] sm:$0xff]
        %v637 = vld [vmem:[#allocation2 + $0x38] sm:$0xff]
        %v638 = vpack.c.bf16 %v631, %v630
        %v639 = vpack.c.bf16 %v633, %v632
        %v640 = vpack.c.bf16 %v635, %v634
        %v641 = vpack.c.bf16 %v637, %v636
        %646 = vrot.lane.b32.xlu0 %v638, 11
        %v647 = vpop.permute.xlu0 %646
        %648 = vrot.lane.b32.xlu0 %v639, 11
        %v649 = vpop.permute.xlu0 %648
        %650 = vrot.lane.b32.xlu0 %v640, 11
        %v651 = vpop.permute.xlu0 %650
        %652 = vrot.lane.b32.xlu0 %v641, 11
        %v653 = vpop.permute.xlu0 %652
        %vm654 = vcmask 89088
        %v657 = vsel %vm654, 0, %v647
        %v660 = vsel %vm654, 0, %v649
        %v663 = vsel %vm654, 0, %v651
        %v666 = vsel %vm654, 0, %v653
        %668 = vrot.lane.b32.xlu0 %v638, 10
        %v669 = vpop.permute.xlu0 %668
        %670 = vrot.lane.b32.xlu0 %v639, 10
        %v671 = vpop.permute.xlu0 %670
        %672 = vrot.lane.b32.xlu0 %v640, 10
        %v673 = vpop.permute.xlu0 %672
        %674 = vrot.lane.b32.xlu0 %v641, 10
        %v675 = vpop.permute.xlu0 %674
        %vm676 = vcmask 80896
        %v678 = vsel %vm676, 0, %v669
        %v681 = vsel %vm676, 0, %v671
        %v684 = vsel %vm676, 0, %v673
        %v687 = vsel %vm676, 0, %v675
        %689 = vrot.lane.b32.xlu0 %v638, 9
        %v690 = vpop.permute.xlu0 %689
        %691 = vrot.lane.b32.xlu0 %v639, 9
        %v692 = vpop.permute.xlu0 %691
        %693 = vrot.lane.b32.xlu0 %v640, 9
        %v694 = vpop.permute.xlu0 %693
        %695 = vrot.lane.b32.xlu0 %v641, 9
        %v696 = vpop.permute.xlu0 %695
        %vm697 = vcmask 72704
        %v699 = vsel %vm697, 0, %v690
        %v702 = vsel %vm697, 0, %v692
        %v705 = vsel %vm697, 0, %v694
        %v708 = vsel %vm697, 0, %v696
        %710 = vrot.lane.b32.xlu0 %v638, 1
        %v711 = vpop.permute.xlu0 %710
        %712 = vrot.lane.b32.xlu0 %v639, 1
        %v713 = vpop.permute.xlu0 %712
        %714 = vrot.lane.b32.xlu0 %v640, 1
        %v715 = vpop.permute.xlu0 %714
        %716 = vrot.lane.b32.xlu0 %v641, 1
        %v717 = vpop.permute.xlu0 %716
        %vm718 = vcmask 7168
        %v720 = vsel %vm718, 0, %v711
        %v723 = vsel %vm718, 0, %v713
        %v726 = vsel %vm718, 0, %v715
        %v729 = vsel %vm718, 0, %v717
        %731 = vrot.lane.b32.xlu0 %v638, 127
        %v732 = vpop.permute.xlu0 %731
        %733 = vrot.lane.b32.xlu0 %v639, 127
        %v734 = vpop.permute.xlu0 %733
        %735 = vrot.lane.b32.xlu0 %v640, 127
        %v736 = vpop.permute.xlu0 %735
        %737 = vrot.lane.b32.xlu0 %v641, 127
        %v738 = vpop.permute.xlu0 %737
        %vm739 = vcmask 1039360
        %v741 = vsel %vm739, %v732, 0
        %v744 = vsel %vm739, %v734, 0
        %v747 = vsel %vm739, %v736, 0
        %v750 = vsel %vm739, %v738, 0
        %752 = vrot.lane.b32.xlu0 %v638, 119
        %v753 = vpop.permute.xlu0 %752
        %754 = vrot.lane.b32.xlu0 %v639, 119
        %v755 = vpop.permute.xlu0 %754
        %756 = vrot.lane.b32.xlu0 %v640, 119
        %v757 = vpop.permute.xlu0 %756
        %758 = vrot.lane.b32.xlu0 %v641, 119
        %v759 = vpop.permute.xlu0 %758
        %vm760 = vcmask 973824
        %v762 = vsel %vm760, %v753, 0
        %v765 = vsel %vm760, %v755, 0
        %v768 = vsel %vm760, %v757, 0
        %v771 = vsel %vm760, %v759, 0
        %773 = vrot.lane.b32.xlu0 %v638, 118
        %v774 = vpop.permute.xlu0 %773
        %775 = vrot.lane.b32.xlu0 %v639, 118
        %v776 = vpop.permute.xlu0 %775
        %777 = vrot.lane.b32.xlu0 %v640, 118
        %v778 = vpop.permute.xlu0 %777
        %779 = vrot.lane.b32.xlu0 %v641, 118
        %v780 = vpop.permute.xlu0 %779
        %vm781 = vcmask 965632
        %v783 = vsel %vm781, %v774, 0
        %v786 = vsel %vm781, %v776, 0
        %v789 = vsel %vm781, %v778, 0
        %v792 = vsel %vm781, %v780, 0
        %794 = vrot.lane.b32.xlu0 %v638, 117
        %v795 = vpop.permute.xlu0 %794
        %796 = vrot.lane.b32.xlu0 %v639, 117
        %v797 = vpop.permute.xlu0 %796
        %798 = vrot.lane.b32.xlu0 %v640, 117
        %v799 = vpop.permute.xlu0 %798
        %800 = vrot.lane.b32.xlu0 %v641, 117
        %v801 = vpop.permute.xlu0 %800
        %vm802 = vcmask 957440
        %v804 = vsel %vm802, %v795, 0
        %v807 = vsel %vm802, %v797, 0
        %v810 = vsel %vm802, %v799, 0
        %v813 = vsel %vm802, %v801, 0
        %v815 = vld [vmem:[%s2] sm:$0xff]
        %v816 = vld [vmem:[%s2 + $0x8] sm:$0xff]
        %v817 = vld [vmem:[%s2 + $0x10] sm:$0xf]
        %v818 = vld [vmem:[%s2 + $0x14] sm:$0xff]
        %v819 = vld [vmem:[%s2 + $0x1c] sm:$0xff]
        %v820 = vld [vmem:[%s2 + $0x24] sm:$0xf]
        %v821 = vld [vmem:[%s2 + $0x28] sm:$0xff]
        %v822 = vld [vmem:[%s2 + $0x30] sm:$0xff]
        %v823 = vld [vmem:[%s2 + $0x38] sm:$0xf]
        %v824 = vld [vmem:[%s2 + $0x3c] sm:$0xff]
        %v825 = vld [vmem:[%s2 + $0x44] sm:$0xff]
        %v826 = vld [vmem:[%s2 + $0x4c] sm:$0xf]
        %v827 = vld [vmem:[%s2 + $0x50] sm:$0xff]
        %v828 = vld [vmem:[%s2 + $0x58] sm:$0xff]
        %v829 = vld [vmem:[%s2 + $0x60] sm:$0xf]
        %v830 = vld [vmem:[%s2 + $0x64] sm:$0xff]
        %v831 = vld [vmem:[%s2 + $0x6c] sm:$0xff]
        %v832 = vld [vmem:[%s2 + $0x74] sm:$0xf]
        %v833 = vld [vmem:[%s2 + $0x78] sm:$0xff]
        %v834 = vld [vmem:[%s2 + $0x80] sm:$0xff]
        %v835 = vld [vmem:[%s2 + $0x88] sm:$0xf]
        %v836 = vld [vmem:[%s2 + $0x8c] sm:$0xff]
        %v837 = vld [vmem:[%s2 + $0x94] sm:$0xff]
        %v838 = vld [vmem:[%s2 + $0x9c] sm:$0xf]
        %v839 = vld [vmem:[%s3] sm:$0xff]
        %v840 = vld [vmem:[%s3 + $0x8] sm:$0xff]
        %v841 = vld [vmem:[%s3 + $0x10] sm:$0xff]
        %v842 = vld [vmem:[%s3 + $0x18] sm:$0xff]
        %v843 = vld [vmem:[%s3 + $0x20] sm:$0xff]
        %v844 = vld [vmem:[%s3 + $0x28] sm:$0xff]
        %v845 = vld [vmem:[%s3 + $0x30] sm:$0xff]
        %v846 = vld [vmem:[%s3 + $0x38] sm:$0xff]
        %848 = vset.pattern.permute.xlu0 0
        %849 = vperm.xlu0 %848, %v839
        %v850 = vpop.permute.xlu0 %849
        %853 = vset.pattern.permute.xlu0 0
        %854 = vperm.xlu0 %853, %v840
        %v855 = vpop.permute.xlu0 %854
        %858 = vset.pattern.permute.xlu0 0
        %859 = vperm.xlu0 %858, %v841
        %v860 = vpop.permute.xlu0 %859
        %863 = vset.pattern.permute.xlu0 0
        %864 = vperm.xlu0 %863, %v842
        %v865 = vpop.permute.xlu0 %864
        %868 = vset.pattern.permute.xlu0 0
        %869 = vperm.xlu0 %868, %v843
        %v870 = vpop.permute.xlu0 %869
        %873 = vset.pattern.permute.xlu0 0
        %874 = vperm.xlu0 %873, %v844
        %v875 = vpop.permute.xlu0 %874
        %878 = vset.pattern.permute.xlu0 0
        %879 = vperm.xlu0 %878, %v845
        %v880 = vpop.permute.xlu0 %879
        %883 = vset.pattern.permute.xlu0 0
        %884 = vperm.xlu0 %883, %v846
        %v885 = vpop.permute.xlu0 %884
        %v911 = vunpack.c.l.b16 %v815
        %v912 = vunpack.c.h.b16 %v815
        %v913 = vunpack.c.l.b16 %v816
        %v914 = vunpack.c.h.b16 %v816
        %v915 = vunpack.c.l.b16 %v817
        %v916 = vunpack.c.l.b16 %v818
        %v917 = vunpack.c.h.b16 %v818
        %v918 = vunpack.c.l.b16 %v819
        %v919 = vunpack.c.h.b16 %v819
        %v920 = vunpack.c.l.b16 %v820
        %v921 = vunpack.c.l.b16 %v821
        %v922 = vunpack.c.h.b16 %v821
        %v923 = vunpack.c.l.b16 %v822
        %v924 = vunpack.c.h.b16 %v822
        %v925 = vunpack.c.l.b16 %v823
        %v926 = vunpack.c.l.b16 %v824
        %v927 = vunpack.c.h.b16 %v824
        %v928 = vunpack.c.l.b16 %v825
        %v929 = vunpack.c.h.b16 %v825
        %v930 = vunpack.c.l.b16 %v826
        %v931 = vunpack.c.l.b16 %v827
        %v932 = vunpack.c.h.b16 %v827
        %v933 = vunpack.c.l.b16 %v828
        %v934 = vunpack.c.h.b16 %v828
        %v935 = vunpack.c.l.b16 %v829
        %v936 = vunpack.c.l.b16 %v830
        %v937 = vunpack.c.h.b16 %v830
        %v938 = vunpack.c.l.b16 %v831
        %v939 = vunpack.c.h.b16 %v831
        %v940 = vunpack.c.l.b16 %v832
        %v941 = vunpack.c.l.b16 %v833
        %v942 = vunpack.c.h.b16 %v833
        %v943 = vunpack.c.l.b16 %v834
        %v944 = vunpack.c.h.b16 %v834
        %v945 = vunpack.c.l.b16 %v835
        %v946 = vunpack.c.l.b16 %v836
        %v947 = vunpack.c.h.b16 %v836
        %v948 = vunpack.c.l.b16 %v837
        %v949 = vunpack.c.h.b16 %v837
        %v950 = vunpack.c.l.b16 %v838
        %v951 = vpack.c.b16 %v916, %v911
        %v952 = vpack.c.b16 %v917, %v912
        %v953 = vpack.c.b16 %v918, %v913
        %v954 = vpack.c.b16 %v919, %v914
        %v955 = vpack.c.b16 %v920, %v915
        %v956 = vpack.c.b16 %v926, %v921
        %v957 = vpack.c.b16 %v927, %v922
        %v958 = vpack.c.b16 %v928, %v923
        %v959 = vpack.c.b16 %v929, %v924
        %v960 = vpack.c.b16 %v930, %v925
        %v961 = vpack.c.b16 %v936, %v931
        %v962 = vpack.c.b16 %v937, %v932
        %v963 = vpack.c.b16 %v938, %v933
        %v964 = vpack.c.b16 %v939, %v934
        %v965 = vpack.c.b16 %v940, %v935
        %v966 = vpack.c.b16 %v946, %v941
        %v967 = vpack.c.b16 %v947, %v942
        %v968 = vpack.c.b16 %v948, %v943
        %v969 = vpack.c.b16 %v949, %v944
        %v970 = vpack.c.b16 %v950, %v945
        %vm987 = vcmask 523264
        %v989 = vsel %vm987, %v955, 0
        %v992 = vsel %vm987, %v960, 0
        %v995 = vsel %vm987, %v965, 0
        %v998 = vsel %vm987, %v970, 0
        %1000 = vmatprep.subr.bf16.mxu0 0
        %1001 = vmatpush1.bf16.msra.mxu0 %v657
        %1002 = vmatprep.subr.bf16.mxu0 0
        %1003 = vmatpush1.bf16.msra.mxu0 %v660
        %1004 = vmatprep.subr.bf16.mxu0 0
        %1005 = vmatpush1.bf16.msra.mxu0 %v663
        %1006 = vmatprep.subr.bf16.mxu0 0
        %1007 = vmatpush1.bf16.msra.mxu0 %v666
        %1008 = vmatprep.subr.bf16.mxu0 0
        %1009 = vmatpush1.bf16.msra.mxu0 %v678
        %1010 = vmatprep.subr.bf16.mxu0 0
        %1011 = vmatpush1.bf16.msra.mxu0 %v681
        %1012 = vmatprep.subr.bf16.mxu0 0
        %1013 = vmatpush1.bf16.msra.mxu0 %v684
        %1014 = vmatprep.subr.bf16.mxu0 0
        %1015 = vmatpush1.bf16.msra.mxu0 %v687
        %1016 = vmatprep.subr.bf16.mxu0 0
        %1017 = vmatpush1.bf16.msra.mxu0 %v699
        %1018 = vmatprep.subr.bf16.mxu0 0
        %1019 = vmatpush1.bf16.msra.mxu0 %v702
        %1020 = vmatprep.subr.bf16.mxu0 0
        %1021 = vmatpush1.bf16.msra.mxu0 %v705
        %1022 = vmatprep.subr.bf16.mxu0 0
        %1023 = vmatpush1.bf16.msra.mxu0 %v708
        %1024 = vmatprep.subr.bf16.mxu0 0
        %1025 = vmatpush1.bf16.msra.mxu0 %v720
        %1026 = vmatprep.subr.bf16.mxu0 0
        %1027 = vmatpush1.bf16.msra.mxu0 %v723
        %1028 = vmatprep.subr.bf16.mxu0 0
        %1029 = vmatpush1.bf16.msra.mxu0 %v726
        %1030 = vmatprep.subr.bf16.mxu0 0
        %1031 = vmatpush1.bf16.msra.mxu0 %v729
        %1032 = vmatprep.mubr.bf16.mxu0 %v952
        %1033 = vmatmul.mubr.bf16.gmra.mrb[0].mxu0 %v951
        %v1034 = vpop.f32.mrb[0].mxu0
        %v1035 = vadd.f32 %v850, %v1034
        %v1036 = vpop.f32.mrb[0].mxu0
        %v1037 = vpop.f32.mrb[0].mxu0
        %v1038 = vadd.f32 %v855, %v1037
        %v1039 = vpop.f32.mrb[0].mxu0
        %1040 = vmatprep.mubr.bf16.mxu0 %v957
        %1041 = vmatmul.mubr.bf16.gmra.mrb[0].mxu0 %v956
        %v1042 = vpop.f32.mrb[0].mxu0
        %v1043 = vadd.f32 %v860, %v1042
        %v1044 = vpop.f32.mrb[0].mxu0
        %v1045 = vpop.f32.mrb[0].mxu0
        %v1046 = vadd.f32 %v865, %v1045
        %v1047 = vpop.f32.mrb[0].mxu0
        %1048 = vmatprep.mubr.bf16.mxu0 %v962
        %1049 = vmatmul.mubr.bf16.gmra.mrb[0].mxu0 %v961
        %v1050 = vpop.f32.mrb[0].mxu0
        %v1051 = vadd.f32 %v870, %v1050
        %v1052 = vpop.f32.mrb[0].mxu0
        %v1053 = vpop.f32.mrb[0].mxu0
        %v1054 = vadd.f32 %v875, %v1053
        %v1055 = vpop.f32.mrb[0].mxu0
        %1056 = vmatprep.mubr.bf16.mxu0 %v967
        %1057 = vmatmul.mubr.bf16.gmra.mrb[0].mxu0 %v966
        %v1058 = vpop.f32.mrb[0].mxu0
        %v1059 = vadd.f32 %v880, %v1058
        %v1060 = vpop.f32.mrb[0].mxu0
        %v1061 = vpop.f32.mrb[0].mxu0
        %v1062 = vadd.f32 %v885, %v1061
        %v1063 = vpop.f32.mrb[0].mxu0
        %1064 = vdwg.mxu0
        %1065 = vmatprep.subr.bf16.mxu0 0
        %1066 = vmatpush1.bf16.msra.mxu0 %v638
        %1067 = vmatprep.subr.bf16.mxu0 0
        %1068 = vmatpush1.bf16.msra.mxu0 %v639
        %1069 = vmatprep.subr.bf16.mxu0 0
        %1070 = vmatpush1.bf16.msra.mxu0 %v640
        %1071 = vmatprep.subr.bf16.mxu0 0
        %1072 = vmatpush1.bf16.msra.mxu0 %v641
        %1073 = vmatprep.subr.bf16.mxu0 0
        %1074 = vmatpush1.bf16.msra.mxu0 %v741
        %1075 = vmatprep.subr.bf16.mxu0 0
        %1076 = vmatpush1.bf16.msra.mxu0 %v744
        %1077 = vmatprep.subr.bf16.mxu0 0
        %1078 = vmatpush1.bf16.msra.mxu0 %v747
        %1079 = vmatprep.subr.bf16.mxu0 0
        %1080 = vmatpush1.bf16.msra.mxu0 %v750
        %1081 = vmatprep.subr.bf16.mxu0 0
        %1082 = vmatpush1.bf16.msra.mxu0 %v762
        %1083 = vmatprep.subr.bf16.mxu0 0
        %1084 = vmatpush1.bf16.msra.mxu0 %v765
        %1085 = vmatprep.subr.bf16.mxu0 0
        %1086 = vmatpush1.bf16.msra.mxu0 %v768
        %1087 = vmatprep.subr.bf16.mxu0 0
        %1088 = vmatpush1.bf16.msra.mxu0 %v771
        %1089 = vmatprep.subr.bf16.mxu0 0
        %1090 = vmatpush1.bf16.msra.mxu0 %v783
        %1091 = vmatprep.subr.bf16.mxu0 0
        %1092 = vmatpush1.bf16.msra.mxu0 %v786
        %1093 = vmatprep.subr.bf16.mxu0 0
        %1094 = vmatpush1.bf16.msra.mxu0 %v789
        %1095 = vmatprep.subr.bf16.mxu0 0
        %1096 = vmatpush1.bf16.msra.mxu0 %v792
        %1097 = vmatprep.mubr.bf16.mxu0 %v954
        %1098 = vmatmul.mubr.bf16.gmra.mrb[0].mxu0 %v953
        %v1099 = vpop.f32.mrb[0].mxu0
        %v1100 = vadd.f32 %v1035, %v1099
        %v1101 = vpop.f32.mrb[0].mxu0
        %v1102 = vpop.f32.mrb[0].mxu0
        %v1103 = vadd.f32 %v1038, %v1102
        %v1104 = vpop.f32.mrb[0].mxu0
        %1105 = vmatprep.mubr.bf16.mxu0 %v959
        %1106 = vmatmul.mubr.bf16.gmra.mrb[0].mxu0 %v958
        %v1107 = vpop.f32.mrb[0].mxu0
        %v1108 = vadd.f32 %v1043, %v1107
        %v1109 = vpop.f32.mrb[0].mxu0
        %v1110 = vpop.f32.mrb[0].mxu0
        %v1111 = vadd.f32 %v1046, %v1110
        %v1112 = vpop.f32.mrb[0].mxu0
        %1113 = vmatprep.mubr.bf16.mxu0 %v964
        %1114 = vmatmul.mubr.bf16.gmra.mrb[0].mxu0 %v963
        %v1115 = vpop.f32.mrb[0].mxu0
        %v1116 = vadd.f32 %v1051, %v1115
        %v1117 = vpop.f32.mrb[0].mxu0
        %v1118 = vpop.f32.mrb[0].mxu0
        %v1119 = vadd.f32 %v1054, %v1118
        %v1120 = vpop.f32.mrb[0].mxu0
        %1121 = vmatprep.mubr.bf16.mxu0 %v969
        %1122 = vmatmul.mubr.bf16.gmra.mrb[0].mxu0 %v968
        %v1123 = vpop.f32.mrb[0].mxu0
        %v1124 = vadd.f32 %v1059, %v1123
        %v1125 = vpop.f32.mrb[0].mxu0
        %v1126 = vpop.f32.mrb[0].mxu0
        %v1127 = vadd.f32 %v1062, %v1126
        %v1128 = vpop.f32.mrb[0].mxu0
        %1129 = vdwg.mxu0
        %1130 = vmatprep.subr.bf16.mxu0 0
        %1131 = vmatpush1.bf16.msra.mxu0 %v804
        %1132 = vmatprep.subr.bf16.mxu0 0
        %1133 = vmatpush1.bf16.msra.mxu0 %v807
        %1134 = vmatprep.subr.bf16.mxu0 0
        %1135 = vmatpush1.bf16.msra.mxu0 %v810
        %1136 = vmatprep.subr.bf16.mxu0 0
        %1137 = vmatpush1.bf16.msra.mxu0 %v813
        %1138 = vmatprep.subr.bf16.mxu0 0
        %1139 = vmatpush1.bf16.msra.mxu0 0
        %1140 = vmatprep.subr.bf16.mxu0 0
        %1141 = vmatpush1.bf16.msra.mxu0 0
        %1142 = vmatprep.subr.bf16.mxu0 0
        %1143 = vmatpush1.bf16.msra.mxu0 0
        %1144 = vmatprep.subr.bf16.mxu0 0
        %1145 = vmatpush1.bf16.msra.mxu0 0
        %1146 = vmatprep.subr.bf16.mxu0 0
        %1147 = vmatpush1.bf16.msra.mxu0 0
        %1148 = vmatprep.subr.bf16.mxu0 0
        %1149 = vmatpush1.bf16.msra.mxu0 0
        %1150 = vmatprep.subr.bf16.mxu0 0
        %1151 = vmatpush1.bf16.msra.mxu0 0
        %1152 = vmatprep.subr.bf16.mxu0 0
        %1153 = vmatpush1.bf16.msra.mxu0 0
        %1154 = vmatprep.subr.bf16.mxu0 0
        %1155 = vmatpush1.bf16.msra.mxu0 0
        %1156 = vmatprep.subr.bf16.mxu0 0
        %1157 = vmatpush1.bf16.msra.mxu0 0
        %1158 = vmatprep.subr.bf16.mxu0 0
        %1159 = vmatpush1.bf16.msra.mxu0 0
        %1160 = vmatprep.subr.bf16.mxu0 0
        %1161 = vmatpush1.bf16.msra.mxu0 0
        %1162 = vmatprep.mubr.bf16.mxu0 0
        %1163 = vmatmul.mubr.bf16.gmra.mrb[0].mxu0 %v989
        %v1164 = vpop.f32.mrb[0].mxu0
        %v1165 = vadd.f32 %v1100, %v1164
        %v1166 = vpop.f32.mrb[0].mxu0
        %v1167 = vpop.f32.mrb[0].mxu0
        %v1168 = vadd.f32 %v1103, %v1167
        %v1169 = vpop.f32.mrb[0].mxu0
        %1170 = vmatprep.mubr.bf16.mxu0 0
        %1171 = vmatmul.mubr.bf16.gmra.mrb[0].mxu0 %v992
        %v1172 = vpop.f32.mrb[0].mxu0
        %v1173 = vadd.f32 %v1108, %v1172
        %v1174 = vpop.f32.mrb[0].mxu0
        %v1175 = vpop.f32.mrb[0].mxu0
        %v1176 = vadd.f32 %v1111, %v1175
        %v1177 = vpop.f32.mrb[0].mxu0
        %1178 = vmatprep.mubr.bf16.mxu0 0
        %1179 = vmatmul.mubr.bf16.gmra.mrb[0].mxu0 %v995
        %v1180 = vpop.f32.mrb[0].mxu0
        %v1181 = vadd.f32 %v1116, %v1180
        %v1182 = vpop.f32.mrb[0].mxu0
        %v1183 = vpop.f32.mrb[0].mxu0
        %v1184 = vadd.f32 %v1119, %v1183
        %v1185 = vpop.f32.mrb[0].mxu0
        %1186 = vmatprep.mubr.bf16.mxu0 0
        %1187 = vmatmul.mubr.bf16.gmra.mrb[0].mxu0 %v998
        %v1188 = vpop.f32.mrb[0].mxu0
        %v1189 = vadd.f32 %v1124, %v1188
        %v1190 = vpop.f32.mrb[0].mxu0
        %v1191 = vpop.f32.mrb[0].mxu0
        %v1192 = vadd.f32 %v1127, %v1191
        %v1193 = vpop.f32.mrb[0].mxu0
        %1194 = vdwg.mxu0
        %v1195 = vmax.f32 %v1165, 0.0
        %v1196 = vmax.f32 %v1168, 0.0
        %v1197 = vmax.f32 %v1173, 0.0
        %v1198 = vmax.f32 %v1176, 0.0
        %v1199 = vmax.f32 %v1181, 0.0
        %v1200 = vmax.f32 %v1184, 0.0
        %v1201 = vmax.f32 %v1189, 0.0
        %v1202 = vmax.f32 %v1192, 0.0
        %v1204 = vlaneseq
        %v1205 = vshrl.u32 %v1204, 7
        %v1206 = vsub.s32 0, %v1205
        %v1207 = vrot.slane %v629, %v1206
        %v1209 = vmul.f32 %v1195, %v1207
        %v1210 = vmul.f32 %v1196, %v1207
        %v1211 = vmul.f32 %v1197, %v1207
        %v1212 = vmul.f32 %v1198, %v1207
        %v1213 = vmul.f32 %v1199, %v1207
        %v1214 = vmul.f32 %v1200, %v1207
        %v1215 = vmul.f32 %v1201, %v1207
        %v1216 = vmul.f32 %v1202, %v1207
        %v1217 = vpack.c.bf16 %v1210, %v1209
        %v1218 = vpack.c.bf16 %v1212, %v1211
        %v1219 = vpack.c.bf16 %v1214, %v1213
        %v1220 = vpack.c.bf16 %v1216, %v1215
        %1225 = vrot.lane.b32.xlu0 %v1217, 11
        %v1226 = vpop.permute.xlu0 %1225
        %1227 = vrot.lane.b32.xlu0 %v1218, 11
        %v1228 = vpop.permute.xlu0 %1227
        %1229 = vrot.lane.b32.xlu0 %v1219, 11
        %v1230 = vpop.permute.xlu0 %1229
        %1231 = vrot.lane.b32.xlu0 %v1220, 11
        %v1232 = vpop.permute.xlu0 %1231
        %v1234 = vsel %vm654, 0, %v1226
        %v1237 = vsel %vm654, 0, %v1228
        %v1240 = vsel %vm654, 0, %v1230
        %v1243 = vsel %vm654, 0, %v1232
        %1245 = vrot.lane.b32.xlu0 %v1217, 10
        %v1246 = vpop.permute.xlu0 %1245
        %1247 = vrot.lane.b32.xlu0 %v1218, 10
        %v1248 = vpop.permute.xlu0 %1247
        %1249 = vrot.lane.b32.xlu0 %v1219, 10
        %v1250 = vpop.permute.xlu0 %1249
        %1251 = vrot.lane.b32.xlu0 %v1220, 10
        %v1252 = vpop.permute.xlu0 %1251
        %v1254 = vsel %vm676, 0, %v1246
        %v1257 = vsel %vm676, 0, %v1248
        %v1260 = vsel %vm676, 0, %v1250
        %v1263 = vsel %vm676, 0, %v1252
        %1265 = vrot.lane.b32.xlu0 %v1217, 9
        %v1266 = vpop.permute.xlu0 %1265
        %1267 = vrot.lane.b32.xlu0 %v1218, 9
        %v1268 = vpop.permute.xlu0 %1267
        %1269 = vrot.lane.b32.xlu0 %v1219, 9
        %v1270 = vpop.permute.xlu0 %1269
        %1271 = vrot.lane.b32.xlu0 %v1220, 9
        %v1272 = vpop.permute.xlu0 %1271
        %v1274 = vsel %vm697, 0, %v1266
        %v1277 = vsel %vm697, 0, %v1268
        %v1280 = vsel %vm697, 0, %v1270
        %v1283 = vsel %vm697, 0, %v1272
        %1285 = vrot.lane.b32.xlu0 %v1217, 1
        %v1286 = vpop.permute.xlu0 %1285
        %1287 = vrot.lane.b32.xlu0 %v1218, 1
        %v1288 = vpop.permute.xlu0 %1287
        %1289 = vrot.lane.b32.xlu0 %v1219, 1
        %v1290 = vpop.permute.xlu0 %1289
        %1291 = vrot.lane.b32.xlu0 %v1220, 1
        %v1292 = vpop.permute.xlu0 %1291
        %v1294 = vsel %vm718, 0, %v1286
        %v1297 = vsel %vm718, 0, %v1288
        %v1300 = vsel %vm718, 0, %v1290
        %v1303 = vsel %vm718, 0, %v1292
        %1305 = vrot.lane.b32.xlu0 %v1217, 127
        %v1306 = vpop.permute.xlu0 %1305
        %1307 = vrot.lane.b32.xlu0 %v1218, 127
        %v1308 = vpop.permute.xlu0 %1307
        %1309 = vrot.lane.b32.xlu0 %v1219, 127
        %v1310 = vpop.permute.xlu0 %1309
        %1311 = vrot.lane.b32.xlu0 %v1220, 127
        %v1312 = vpop.permute.xlu0 %1311
        %v1314 = vsel %vm739, %v1306, 0
        %v1317 = vsel %vm739, %v1308, 0
        %v1320 = vsel %vm739, %v1310, 0
        %v1323 = vsel %vm739, %v1312, 0
        %1325 = vrot.lane.b32.xlu0 %v1217, 119
        %v1326 = vpop.permute.xlu0 %1325
        %1327 = vrot.lane.b32.xlu0 %v1218, 119
        %v1328 = vpop.permute.xlu0 %1327
        %1329 = vrot.lane.b32.xlu0 %v1219, 119
        %v1330 = vpop.permute.xlu0 %1329
        %1331 = vrot.lane.b32.xlu0 %v1220, 119
        %v1332 = vpop.permute.xlu0 %1331
        %v1334 = vsel %vm760, %v1326, 0
        %v1337 = vsel %vm760, %v1328, 0
        %v1340 = vsel %vm760, %v1330, 0
        %v1343 = vsel %vm760, %v1332, 0
        %1345 = vrot.lane.b32.xlu0 %v1217, 118
        %v1346 = vpop.permute.xlu0 %1345
        %1347 = vrot.lane.b32.xlu0 %v1218, 118
        %v1348 = vpop.permute.xlu0 %1347
        %1349 = vrot.lane.b32.xlu0 %v1219, 118
        %v1350 = vpop.permute.xlu0 %1349
        %1351 = vrot.lane.b32.xlu0 %v1220, 118
        %v1352 = vpop.permute.xlu0 %1351
        %v1354 = vsel %vm781, %v1346, 0
        %v1357 = vsel %vm781, %v1348, 0
        %v1360 = vsel %vm781, %v1350, 0
        %v1363 = vsel %vm781, %v1352, 0
        %1365 = vrot.lane.b32.xlu0 %v1217, 117
        %v1366 = vpop.permute.xlu0 %1365
        %1367 = vrot.lane.b32.xlu0 %v1218, 117
        %v1368 = vpop.permute.xlu0 %1367
        %1369 = vrot.lane.b32.xlu0 %v1219, 117
        %v1370 = vpop.permute.xlu0 %1369
        %1371 = vrot.lane.b32.xlu0 %v1220, 117
        %v1372 = vpop.permute.xlu0 %1371
        %v1374 = vsel %vm802, %v1366, 0
        %v1377 = vsel %vm802, %v1368, 0
        %v1380 = vsel %vm802, %v1370, 0
        %v1383 = vsel %vm802, %v1372, 0
        %v1385 = vld [vmem:[#allocation7] sm:$0xff]
        %v1386 = vld [vmem:[#allocation7 + $0x8] sm:$0xff]
        %v1387 = vld [vmem:[#allocation7 + $0x10] sm:$0xf]
        %v1388 = vld [vmem:[#allocation7 + $0x14] sm:$0xff]
        %v1389 = vld [vmem:[#allocation7 + $0x1c] sm:$0xff]
        %v1390 = vld [vmem:[#allocation7 + $0x24] sm:$0xf]
        %v1391 = vld [vmem:[#allocation7 + $0x28] sm:$0xff]
        %v1392 = vld [vmem:[#allocation7 + $0x30] sm:$0xff]
        %v1393 = vld [vmem:[#allocation7 + $0x38] sm:$0xf]
        %v1394 = vld [vmem:[#allocation7 + $0x3c] sm:$0xff]
        %v1395 = vld [vmem:[#allocation7 + $0x44] sm:$0xff]
        %v1396 = vld [vmem:[#allocation7 + $0x4c] sm:$0xf]
        %v1397 = vld [vmem:[#allocation7 + $0x50] sm:$0xff]
        %v1398 = vld [vmem:[#allocation7 + $0x58] sm:$0xff]
        %v1399 = vld [vmem:[#allocation7 + $0x60] sm:$0xf]
        %v1400 = vld [vmem:[#allocation7 + $0x64] sm:$0xff]
        %v1401 = vld [vmem:[#allocation7 + $0x6c] sm:$0xff]
        %v1402 = vld [vmem:[#allocation7 + $0x74] sm:$0xf]
        %v1403 = vld [vmem:[#allocation7 + $0x78] sm:$0xff]
        %v1404 = vld [vmem:[#allocation7 + $0x80] sm:$0xff]
        %v1405 = vld [vmem:[#allocation7 + $0x88] sm:$0xf]
        %v1406 = vld [vmem:[#allocation7 + $0x8c] sm:$0xff]
        %v1407 = vld [vmem:[#allocation7 + $0x94] sm:$0xff]
        %v1408 = vld [vmem:[#allocation7 + $0x9c] sm:$0xf]
        %v1409 = vld [vmem:[%s5] sm:$0xff]
        %v1410 = vld [vmem:[%s5 + $0x8] sm:$0xff]
        %v1411 = vld [vmem:[%s5 + $0x10] sm:$0xff]
        %v1412 = vld [vmem:[%s5 + $0x18] sm:$0xff]
        %v1413 = vld [vmem:[%s5 + $0x20] sm:$0xff]
        %v1414 = vld [vmem:[%s5 + $0x28] sm:$0xff]
        %v1415 = vld [vmem:[%s5 + $0x30] sm:$0xff]
        %v1416 = vld [vmem:[%s5 + $0x38] sm:$0xff]
        %1418 = vset.pattern.permute.xlu0 0
        %1419 = vperm.xlu0 %1418, %v1409
        %v1420 = vpop.permute.xlu0 %1419
        %1423 = vset.pattern.permute.xlu0 0
        %1424 = vperm.xlu0 %1423, %v1410
        %v1425 = vpop.permute.xlu0 %1424
        %1428 = vset.pattern.permute.xlu0 0
        %1429 = vperm.xlu0 %1428, %v1411
        %v1430 = vpop.permute.xlu0 %1429
        %1433 = vset.pattern.permute.xlu0 0
        %1434 = vperm.xlu0 %1433, %v1412
        %v1435 = vpop.permute.xlu0 %1434
        %1438 = vset.pattern.permute.xlu0 0
        %1439 = vperm.xlu0 %1438, %v1413
        %v1440 = vpop.permute.xlu0 %1439
        %1443 = vset.pattern.permute.xlu0 0
        %1444 = vperm.xlu0 %1443, %v1414
        %v1445 = vpop.permute.xlu0 %1444
        %1448 = vset.pattern.permute.xlu0 0
        %1449 = vperm.xlu0 %1448, %v1415
        %v1450 = vpop.permute.xlu0 %1449
        %1453 = vset.pattern.permute.xlu0 0
        %1454 = vperm.xlu0 %1453, %v1416
        %v1455 = vpop.permute.xlu0 %1454
        %v1481 = vunpack.c.l.b16 %v1385
        %v1482 = vunpack.c.h.b16 %v1385
        %v1483 = vunpack.c.l.b16 %v1386
        %v1484 = vunpack.c.h.b16 %v1386
        %v1485 = vunpack.c.l.b16 %v1387
        %v1486 = vunpack.c.l.b16 %v1388
        %v1487 = vunpack.c.h.b16 %v1388
        %v1488 = vunpack.c.l.b16 %v1389
        %v1489 = vunpack.c.h.b16 %v1389
        %v1490 = vunpack.c.l.b16 %v1390
        %v1491 = vunpack.c.l.b16 %v1391
        %v1492 = vunpack.c.h.b16 %v1391
        %v1493 = vunpack.c.l.b16 %v1392
        %v1494 = vunpack.c.h.b16 %v1392
        %v1495 = vunpack.c.l.b16 %v1393
        %v1496 = vunpack.c.l.b16 %v1394
        %v1497 = vunpack.c.h.b16 %v1394
        %v1498 = vunpack.c.l.b16 %v1395
        %v1499 = vunpack.c.h.b16 %v1395
        %v1500 = vunpack.c.l.b16 %v1396
        %v1501 = vunpack.c.l.b16 %v1397
        %v1502 = vunpack.c.h.b16 %v1397
        %v1503 = vunpack.c.l.b16 %v1398
        %v1504 = vunpack.c.h.b16 %v1398
        %v1505 = vunpack.c.l.b16 %v1399
        %v1506 = vunpack.c.l.b16 %v1400
        %v1507 = vunpack.c.h.b16 %v1400
        %v1508 = vunpack.c.l.b16 %v1401
        %v1509 = vunpack.c.h.b16 %v1401
        %v1510 = vunpack.c.l.b16 %v1402
        %v1511 = vunpack.c.l.b16 %v1403
        %v1512 = vunpack.c.h.b16 %v1403
        %v1513 = vunpack.c.l.b16 %v1404
        %v1514 = vunpack.c.h.b16 %v1404
        %v1515 = vunpack.c.l.b16 %v1405
        %v1516 = vunpack.c.l.b16 %v1406
        %v1517 = vunpack.c.h.b16 %v1406
        %v1518 = vunpack.c.l.b16 %v1407
        %v1519 = vunpack.c.h.b16 %v1407
        %v1520 = vunpack.c.l.b16 %v1408
        %v1521 = vpack.c.b16 %v1486, %v1481
        %v1522 = vpack.c.b16 %v1487, %v1482
        %v1523 = vpack.c.b16 %v1488, %v1483
        %v1524 = vpack.c.b16 %v1489, %v1484
        %v1525 = vpack.c.b16 %v1490, %v1485
        %v1526 = vpack.c.b16 %v1496, %v1491
        %v1527 = vpack.c.b16 %v1497, %v1492
        %v1528 = vpack.c.b16 %v1498, %v1493
        %v1529 = vpack.c.b16 %v1499, %v1494
        %v1530 = vpack.c.b16 %v1500, %v1495
        %v1531 = vpack.c.b16 %v1506, %v1501
        %v1532 = vpack.c.b16 %v1507, %v1502
        %v1533 = vpack.c.b16 %v1508, %v1503
        %v1534 = vpack.c.b16 %v1509, %v1504
        %v1535 = vpack.c.b16 %v1510, %v1505
        %v1536 = vpack.c.b16 %v1516, %v1511
        %v1537 = vpack.c.b16 %v1517, %v1512
        %v1538 = vpack.c.b16 %v1518, %v1513
        %v1539 = vpack.c.b16 %v1519, %v1514
        %v1540 = vpack.c.b16 %v1520, %v1515
        %v1558 = vsel %vm987, %v1525, 0
        %v1561 = vsel %vm987, %v1530, 0
        %v1564 = vsel %vm987, %v1535, 0
        %v1567 = vsel %vm987, %v1540, 0
        %1569 = vmatprep.subr.bf16.mxu0 0
        %1570 = vmatpush1.bf16.msra.mxu0 %v1234
        %1571 = vmatprep.subr.bf16.mxu0 0
        %1572 = vmatpush1.bf16.msra.mxu0 %v1237
        %1573 = vmatprep.subr.bf16.mxu0 0
        %1574 = vmatpush1.bf16.msra.mxu0 %v1240
        %1575 = vmatprep.subr.bf16.mxu0 0
        %1576 = vmatpush1.bf16.msra.mxu0 %v1243
        %1577 = vmatprep.subr.bf16.mxu0 0
        %1578 = vmatpush1.bf16.msra.mxu0 %v1254
        %1579 = vmatprep.subr.bf16.mxu0 0
        %1580 = vmatpush1.bf16.msra.mxu0 %v1257
        %1581 = vmatprep.subr.bf16.mxu0 0
        %1582 = vmatpush1.bf16.msra.mxu0 %v1260
        %1583 = vmatprep.subr.bf16.mxu0 0
        %1584 = vmatpush1.bf16.msra.mxu0 %v1263
        %1585 = vmatprep.subr.bf16.mxu0 0
        %1586 = vmatpush1.bf16.msra.mxu0 %v1274
        %1587 = vmatprep.subr.bf16.mxu0 0
        %1588 = vmatpush1.bf16.msra.mxu0 %v1277
        %1589 = vmatprep.subr.bf16.mxu0 0
        %1590 = vmatpush1.bf16.msra.mxu0 %v1280
        %1591 = vmatprep.subr.bf16.mxu0 0
        %1592 = vmatpush1.bf16.msra.mxu0 %v1283
        %1593 = vmatprep.subr.bf16.mxu0 0
        %1594 = vmatpush1.bf16.msra.mxu0 %v1294
        %1595 = vmatprep.subr.bf16.mxu0 0
        %1596 = vmatpush1.bf16.msra.mxu0 %v1297
        %1597 = vmatprep.subr.bf16.mxu0 0
        %1598 = vmatpush1.bf16.msra.mxu0 %v1300
        %1599 = vmatprep.subr.bf16.mxu0 0
        %1600 = vmatpush1.bf16.msra.mxu0 %v1303
        %1601 = vmatprep.mubr.bf16.mxu0 %v1522
        %1602 = vmatmul.mubr.bf16.gmra.mrb[0].mxu0 %v1521
        %v1603 = vpop.f32.mrb[0].mxu0
        %v1604 = vadd.f32 %v1420, %v1603
        %v1605 = vpop.f32.mrb[0].mxu0
        %v1606 = vpop.f32.mrb[0].mxu0
        %v1607 = vadd.f32 %v1425, %v1606
        %v1608 = vpop.f32.mrb[0].mxu0
        %1609 = vmatprep.mubr.bf16.mxu0 %v1527
        %1610 = vmatmul.mubr.bf16.gmra.mrb[0].mxu0 %v1526
        %v1611 = vpop.f32.mrb[0].mxu0
        %v1612 = vadd.f32 %v1430, %v1611
        %v1613 = vpop.f32.mrb[0].mxu0
        %v1614 = vpop.f32.mrb[0].mxu0
        %v1615 = vadd.f32 %v1435, %v1614
        %v1616 = vpop.f32.mrb[0].mxu0
        %1617 = vmatprep.mubr.bf16.mxu0 %v1532
        %1618 = vmatmul.mubr.bf16.gmra.mrb[0].mxu0 %v1531
        %v1619 = vpop.f32.mrb[0].mxu0
        %v1620 = vadd.f32 %v1440, %v1619
        %v1621 = vpop.f32.mrb[0].mxu0
        %v1622 = vpop.f32.mrb[0].mxu0
        %v1623 = vadd.f32 %v1445, %v1622
        %v1624 = vpop.f32.mrb[0].mxu0
        %1625 = vmatprep.mubr.bf16.mxu0 %v1537
        %1626 = vmatmul.mubr.bf16.gmra.mrb[0].mxu0 %v1536
        %v1627 = vpop.f32.mrb[0].mxu0
        %v1628 = vadd.f32 %v1450, %v1627
        %v1629 = vpop.f32.mrb[0].mxu0
        %v1630 = vpop.f32.mrb[0].mxu0
        %v1631 = vadd.f32 %v1455, %v1630
        %v1632 = vpop.f32.mrb[0].mxu0
        %1633 = vdwg.mxu0
        %1634 = vmatprep.subr.bf16.mxu0 0
        %1635 = vmatpush1.bf16.msra.mxu0 %v1217
        %1636 = vmatprep.subr.bf16.mxu0 0
        %1637 = vmatpush1.bf16.msra.mxu0 %v1218
        %1638 = vmatprep.subr.bf16.mxu0 0
        %1639 = vmatpush1.bf16.msra.mxu0 %v1219
        %1640 = vmatprep.subr.bf16.mxu0 0
        %1641 = vmatpush1.bf16.msra.mxu0 %v1220
        %1642 = vmatprep.subr.bf16.mxu0 0
        %1643 = vmatpush1.bf16.msra.mxu0 %v1314
        %1644 = vmatprep.subr.bf16.mxu0 0
        %1645 = vmatpush1.bf16.msra.mxu0 %v1317
        %1646 = vmatprep.subr.bf16.mxu0 0
        %1647 = vmatpush1.bf16.msra.mxu0 %v1320
        %1648 = vmatprep.subr.bf16.mxu0 0
        %1649 = vmatpush1.bf16.msra.mxu0 %v1323
        %1650 = vmatprep.subr.bf16.mxu0 0
        %1651 = vmatpush1.bf16.msra.mxu0 %v1334
        %1652 = vmatprep.subr.bf16.mxu0 0
        %1653 = vmatpush1.bf16.msra.mxu0 %v1337
        %1654 = vmatprep.subr.bf16.mxu0 0
        %1655 = vmatpush1.bf16.msra.mxu0 %v1340
        %1656 = vmatprep.subr.bf16.mxu0 0
        %1657 = vmatpush1.bf16.msra.mxu0 %v1343
        %1658 = vmatprep.subr.bf16.mxu0 0
        %1659 = vmatpush1.bf16.msra.mxu0 %v1354
        %1660 = vmatprep.subr.bf16.mxu0 0
        %1661 = vmatpush1.bf16.msra.mxu0 %v1357
        %1662 = vmatprep.subr.bf16.mxu0 0
        %1663 = vmatpush1.bf16.msra.mxu0 %v1360
        %1664 = vmatprep.subr.bf16.mxu0 0
        %1665 = vmatpush1.bf16.msra.mxu0 %v1363
        %1666 = vmatprep.mubr.bf16.mxu0 %v1524
        %1667 = vmatmul.mubr.bf16.gmra.mrb[0].mxu0 %v1523
        %v1668 = vpop.f32.mrb[0].mxu0
        %v1669 = vadd.f32 %v1604, %v1668
        %v1670 = vpop.f32.mrb[0].mxu0
        %v1671 = vpop.f32.mrb[0].mxu0
        %v1672 = vadd.f32 %v1607, %v1671
        %v1673 = vpop.f32.mrb[0].mxu0
        %1674 = vmatprep.mubr.bf16.mxu0 %v1529
        %1675 = vmatmul.mubr.bf16.gmra.mrb[0].mxu0 %v1528
        %v1676 = vpop.f32.mrb[0].mxu0
        %v1677 = vadd.f32 %v1612, %v1676
        %v1678 = vpop.f32.mrb[0].mxu0
        %v1679 = vpop.f32.mrb[0].mxu0
        %v1680 = vadd.f32 %v1615, %v1679
        %v1681 = vpop.f32.mrb[0].mxu0
        %1682 = vmatprep.mubr.bf16.mxu0 %v1534
        %1683 = vmatmul.mubr.bf16.gmra.mrb[0].mxu0 %v1533
        %v1684 = vpop.f32.mrb[0].mxu0
        %v1685 = vadd.f32 %v1620, %v1684
        %v1686 = vpop.f32.mrb[0].mxu0
        %v1687 = vpop.f32.mrb[0].mxu0
        %v1688 = vadd.f32 %v1623, %v1687
        %v1689 = vpop.f32.mrb[0].mxu0
        %1690 = vmatprep.mubr.bf16.mxu0 %v1539
        %1691 = vmatmul.mubr.bf16.gmra.mrb[0].mxu0 %v1538
        %v1692 = vpop.f32.mrb[0].mxu0
        %v1693 = vadd.f32 %v1628, %v1692
        %v1694 = vpop.f32.mrb[0].mxu0
        %v1695 = vpop.f32.mrb[0].mxu0
        %v1696 = vadd.f32 %v1631, %v1695
        %v1697 = vpop.f32.mrb[0].mxu0
        %1698 = vdwg.mxu0
        %1699 = vmatprep.subr.bf16.mxu0 0
        %1700 = vmatpush1.bf16.msra.mxu0 %v1374
        %1701 = vmatprep.subr.bf16.mxu0 0
        %1702 = vmatpush1.bf16.msra.mxu0 %v1377
        %1703 = vmatprep.subr.bf16.mxu0 0
        %1704 = vmatpush1.bf16.msra.mxu0 %v1380
        %1705 = vmatprep.subr.bf16.mxu0 0
        %1706 = vmatpush1.bf16.msra.mxu0 %v1383
        %1707 = vmatprep.subr.bf16.mxu0 0
        %1708 = vmatpush1.bf16.msra.mxu0 0
        %1709 = vmatprep.subr.bf16.mxu0 0
        %1710 = vmatpush1.bf16.msra.mxu0 0
        %1711 = vmatprep.subr.bf16.mxu0 0
        %1712 = vmatpush1.bf16.msra.mxu0 0
        %1713 = vmatprep.subr.bf16.mxu0 0
        %1714 = vmatpush1.bf16.msra.mxu0 0
        %1715 = vmatprep.subr.bf16.mxu0 0
        %1716 = vmatpush1.bf16.msra.mxu0 0
        %1717 = vmatprep.subr.bf16.mxu0 0
        %1718 = vmatpush1.bf16.msra.mxu0 0
        %1719 = vmatprep.subr.bf16.mxu0 0
        %1720 = vmatpush1.bf16.msra.mxu0 0
        %1721 = vmatprep.subr.bf16.mxu0 0
        %1722 = vmatpush1.bf16.msra.mxu0 0
        %1723 = vmatprep.subr.bf16.mxu0 0
        %1724 = vmatpush1.bf16.msra.mxu0 0
        %1725 = vmatprep.subr.bf16.mxu0 0
        %1726 = vmatpush1.bf16.msra.mxu0 0
        %1727 = vmatprep.subr.bf16.mxu0 0
        %1728 = vmatpush1.bf16.msra.mxu0 0
        %1729 = vmatprep.subr.bf16.mxu0 0
        %1730 = vmatpush1.bf16.msra.mxu0 0
        %1731 = vmatprep.mubr.bf16.mxu0 0
        %1732 = vmatmul.mubr.bf16.gmra.mrb[0].mxu0 %v1558
        %v1733 = vpop.f32.mrb[0].mxu0
        %v1734 = vadd.f32 %v1669, %v1733
        %v1735 = vpop.f32.mrb[0].mxu0
        %v1736 = vpop.f32.mrb[0].mxu0
        %v1737 = vadd.f32 %v1672, %v1736
        %v1738 = vpop.f32.mrb[0].mxu0
        %1739 = vmatprep.mubr.bf16.mxu0 0
        %1740 = vmatmul.mubr.bf16.gmra.mrb[0].mxu0 %v1561
        %v1741 = vpop.f32.mrb[0].mxu0
        %v1742 = vadd.f32 %v1677, %v1741
        %v1743 = vpop.f32.mrb[0].mxu0
        %v1744 = vpop.f32.mrb[0].mxu0
        %v1745 = vadd.f32 %v1680, %v1744
        %v1746 = vpop.f32.mrb[0].mxu0
        %1747 = vmatprep.mubr.bf16.mxu0 0
        %1748 = vmatmul.mubr.bf16.gmra.mrb[0].mxu0 %v1564
        %v1749 = vpop.f32.mrb[0].mxu0
        %v1750 = vadd.f32 %v1685, %v1749
        %v1751 = vpop.f32.mrb[0].mxu0
        %v1752 = vpop.f32.mrb[0].mxu0
        %v1753 = vadd.f32 %v1688, %v1752
        %v1754 = vpop.f32.mrb[0].mxu0
        %1755 = vmatprep.mubr.bf16.mxu0 0
        %1756 = vmatmul.mubr.bf16.gmra.mrb[0].mxu0 %v1567
        %v1757 = vpop.f32.mrb[0].mxu0
        %v1758 = vadd.f32 %v1693, %v1757
        %v1759 = vpop.f32.mrb[0].mxu0
        %v1760 = vpop.f32.mrb[0].mxu0
        %v1761 = vadd.f32 %v1696, %v1760
        %v1762 = vpop.f32.mrb[0].mxu0
        %1763 = vdwg.mxu0
        %v1764 = vmax.f32 %v1734, 0.0
        %v1765 = vmax.f32 %v1737, 0.0
        %v1766 = vmax.f32 %v1742, 0.0
        %v1767 = vmax.f32 %v1745, 0.0
        %v1768 = vmax.f32 %v1750, 0.0
        %v1769 = vmax.f32 %v1753, 0.0
        %v1770 = vmax.f32 %v1758, 0.0
        %v1771 = vmax.f32 %v1761, 0.0
        %v1772 = vmul.f32 %v1764, %v1207
        %v1773 = vmul.f32 %v1765, %v1207
        %v1774 = vmul.f32 %v1766, %v1207
        %v1775 = vmul.f32 %v1767, %v1207
        %v1776 = vmul.f32 %v1768, %v1207
        %v1777 = vmul.f32 %v1769, %v1207
        %v1778 = vmul.f32 %v1770, %v1207
        %v1779 = vmul.f32 %v1771, %v1207
        %v1780 = vld [vmem:[%s6] sm:$0xff]
        %v1781 = vld [vmem:[%s6 + $0x8] sm:$0xff]
        %v1782 = vld [vmem:[%s6 + $0x10] sm:$0xff]
        %v1783 = vld [vmem:[%s6 + $0x18] sm:$0xff]
        %v1784 = vld [vmem:[%s6 + $0x20] sm:$0xff]
        %v1785 = vld [vmem:[%s6 + $0x28] sm:$0xff]
        %v1786 = vld [vmem:[%s6 + $0x30] sm:$0xff]
        %v1787 = vld [vmem:[%s6 + $0x38] sm:$0xff]
        %1789 = vset.pattern.permute.xlu0 0
        %1790 = vperm.xlu0 %1789, %v1780
        %v1791 = vpop.permute.xlu0 %1790
        %1794 = vset.pattern.permute.xlu0 0
        %1795 = vperm.xlu0 %1794, %v1781
        %v1796 = vpop.permute.xlu0 %1795
        %1799 = vset.pattern.permute.xlu0 0
        %1800 = vperm.xlu0 %1799, %v1782
        %v1801 = vpop.permute.xlu0 %1800
        %1804 = vset.pattern.permute.xlu0 0
        %1805 = vperm.xlu0 %1804, %v1783
        %v1806 = vpop.permute.xlu0 %1805
        %1809 = vset.pattern.permute.xlu0 0
        %1810 = vperm.xlu0 %1809, %v1784
        %v1811 = vpop.permute.xlu0 %1810
        %1814 = vset.pattern.permute.xlu0 0
        %1815 = vperm.xlu0 %1814, %v1785
        %v1816 = vpop.permute.xlu0 %1815
        %1819 = vset.pattern.permute.xlu0 0
        %1820 = vperm.xlu0 %1819, %v1786
        %v1821 = vpop.permute.xlu0 %1820
        %1824 = vset.pattern.permute.xlu0 0
        %1825 = vperm.xlu0 %1824, %v1787
        %v1826 = vpop.permute.xlu0 %1825
        %v1828 = vmul.f32 %v1772, %v1791
        %v1829 = vmul.f32 %v1773, %v1796
        %v1830 = vmul.f32 %v1774, %v1801
        %v1831 = vmul.f32 %v1775, %v1806
        %v1832 = vmul.f32 %v1776, %v1811
        %v1833 = vmul.f32 %v1777, %v1816
        %v1834 = vmul.f32 %v1778, %v1821
        %v1835 = vmul.f32 %v1779, %v1826
        %v1836 = vadd.f32 %v1828, %v1829
        %v1837 = vadd.f32 %v1836, %v1830
        %v1838 = vadd.f32 %v1837, %v1831
        %v1839 = vadd.f32 %v1838, %v1832
        %v1840 = vadd.f32 %v1839, %v1833
        %v1841 = vadd.f32 %v1840, %v1834
        %v1842 = vadd.f32 %v1841, %v1835
        %v1843 = vrot.slane %v1842, 4
        %v1844 = vadd.f32 %v1842, %v1843
        %v1845 = vrot.slane %v1844, 2
        %v1846 = vadd.f32 %v1844, %v1845
        %v1847 = vrot.slane %v1846, 1
        %v1848 = vadd.f32 %v1846, %v1847
        %v1849 = vld [vmem:[#allocation3] sm:$0x1]
        %1851 = vset.pattern.permute.xlu0 0
        %1852 = vperm.xlu0 %1851, %v1849
        %v1853 = vpop.permute.xlu0 %1852
        %v1855 = vlaneseq
        %v1856 = vshrl.u32 %v1855, 7
        %v1857 = vsub.s32 0, %v1856
        %v1858 = vrot.slane %v1853, %v1857
        %v1859 = vadd.f32 %v1848, %v1858
        %1860 = vst [vmem:[%s339] sm:$0x1] %v1859
        %s1861 = sand.u32 %s209, 1
        %s1862 = scalar_lea.sflag [#allocation6], %s1861
        %s1863 = sand.u32 %s209, 1
        %s1864 = scalar_lea.vmem [#allocation9], %s1863
        // Predicated region
        $region61: #{tpu_custom_call.1} parent=51 // pred_check
          %p1865 = pneg %p219
        $region62: #{tpu_custom_call.1} parent=51 // pred_check_branch
          %1867 = sbr.rel (%p1865) target = $region64
        $region63: #{tpu_custom_call.1} parent=51 // pred_region
          %s1869 = ssub.s32 16, 16
          %1870 = vsyncadd %s1862, %s1869
          %s1871 = smul.addr %s28, 16
          %s1872 = scalar_lea.hbm %s8, %s1871
          %s1874 = sshll.u32 %s1864, 4
          %s1875 = int_to_ptr.vmem [resolvable:$true] %s1874
          %1877 = dma.vmem_to_hbm [thread:$0]  %s1875, 16, %s1872, %s1862
        $region64: #{tpu_custom_call.1} parent=51 // pred_fallthru
          _
      $region52: #{tpu_custom_call.1} parent=5 // pred_fallthru
        _
      %p1878 = scmp.le.s32.totalorder 2, %s23
      // Predicated region
      $region65: #{tpu_custom_call.1} parent=5 // pred_check
        %p1879 = pneg %p1878
      $region66: #{tpu_custom_call.1} parent=5 // pred_check_branch
        %1881 = sbr.rel (%p1879) target = $region68
      $region67: #{tpu_custom_call.1} parent=5 // pred_region
        %s1882 = ssub.s32 %s23, 2
        // Predicated region
        $region69: #{tpu_custom_call.1} parent=67 // pred_check
          %p1883 = pneg %p225
        $region70: #{tpu_custom_call.1} parent=67 // pred_check_branch
          %1885 = sbr.rel (%p1883) target = $region72
        $region71: #{tpu_custom_call.1} parent=67 // pred_region
          %s1886 = sand.u32 %s210, 1
          %s1887 = scalar_lea.sflag [#allocation6], %s1886
          %s1888 = sand.u32 %s210, 1
          %s1889 = scalar_lea.vmem [#allocation9], %s1888
          %1890 = dma.done %s1887, 16
        $region72: #{tpu_custom_call.1} parent=67 // pred_fallthru
          _
      $region68: #{tpu_custom_call.1} parent=5 // pred_fallthru
        _
    $region6: #{tpu_custom_call.1} parent=1 // loop_footer
      %s27 = sadd.s32 1, %s23
    $region7: #{tpu_custom_call.1} parent=1 // loop_footer_branch
      %22 = sbr.rel target = $region3
    $region8: #{tpu_custom_call.1} parent=1 // loop_exit
      _
    %1891 = vsyncpa [#allocation5], 1
    %s1892 = scalar_lea.sflag [#allocation5], 1
    %1893 = vsyncpa %s1892, 1
    %1894 = vsyncpa [#allocation8], 1
    %1895 = vsyncpa [#allocation6], 1
    %s1896 = scalar_lea.sflag [#allocation6], 1
    %1897 = vsyncpa %s1896, 1

</llo_original>
